<compile_context>
chip_gen: v6e
topology: v6e:2x2x1
jax: 0.10.0
libtpu: 0.0.40
codegen_flags: <defaults>
</compile_context>

<pallas_src>
import functools
import math

import jax
import jax.numpy as jnp
from jax.experimental import pallas as pl
from jax.experimental.pallas import tpu as pltpu


# ----------------------------------------------------------------------------
# Fused multi-head self-attention kernel (one grid step per batch element)
# ----------------------------------------------------------------------------
def _mha_kernel(x_ref, wqkv_ref, bqkv_ref, wo_ref, bo_ref,
                o_ref, aw_ref, *, n_heads, scale):
    x = x_ref[0]                                             # [S, E]
    S, E = x.shape
    dh = E // n_heads

    # Packed QKV projection: one lane-dense MXU pass, N = 3E.
    qkv = (jnp.dot(x, wqkv_ref[...], preferred_element_type=jnp.float32)
           + bqkv_ref[...])                                  # [S, 3E]

    out = jnp.zeros((S, E), jnp.float32)
    aw_sum = jnp.zeros((S, S), jnp.float32)
    for h in range(n_heads):                                 # static unroll
        q_h = qkv[:, h * dh:(h + 1) * dh]                    # [S, dh]
        k_h = qkv[:, E + h * dh:E + (h + 1) * dh]            # [S, dh]
        v_h = qkv[:, 2 * E + h * dh:2 * E + (h + 1) * dh]    # [S, dh]

        # scores without materializing k.T (contract last dims on the MXU)
        s = jax.lax.dot_general(q_h, k_h, (((1,), (1,)), ((), ())),
                                preferred_element_type=jnp.float32) * scale
        m = jnp.max(s, axis=-1, keepdims=True)
        p = jnp.exp(s - m)
        inv = pl.reciprocal(jnp.sum(p, axis=-1, keepdims=True), approx=True)
        p = p * inv                                          # softmax [S, S]
        aw_sum = aw_sum + p

        ctx_h = jnp.dot(p, v_h, preferred_element_type=jnp.float32)  # [S, dh]
        # Accumulate the output projection per head (no lane concat needed).
        out = out + jnp.dot(ctx_h, wo_ref[h * dh:(h + 1) * dh, :],
                            preferred_element_type=jnp.float32)

    o_ref[0] = out + bo_ref[...]                             # [S, E]
    aw_ref[0] = aw_sum * (1.0 / n_heads)   # averaged over heads, like torch


# ----------------------------------------------------------------------------
# Wrapper
# ----------------------------------------------------------------------------
def self_attention(x, params, *, n_heads):
    """x: [B, S, E] -> (attn_out [B, S, E], attn_weights [B, S, S])."""
    B, S, E = x.shape
    dh = E // n_heads
    kern = functools.partial(_mha_kernel, n_heads=n_heads,
                             scale=1.0 / math.sqrt(dh))
    out, aw = pl.pallas_call(
        kern,
        out_shape=(jax.ShapeDtypeStruct((B, S, E), jnp.float32),
                   jax.ShapeDtypeStruct((B, S, S), jnp.float32)),
        grid=(B,),
        in_specs=[
            pl.BlockSpec((1, S, E), lambda i: (i, 0, 0)),      # x (per batch)
            pl.BlockSpec((E, 3 * E), lambda i: (0, 0)),        # packed Wqkv
            pl.BlockSpec((1, 3 * E), lambda i: (0, 0)),        # packed bqkv
            pl.BlockSpec((E, E), lambda i: (0, 0)),            # Wo
            pl.BlockSpec((1, E), lambda i: (0, 0)),            # bo
        ],
        out_specs=[
            pl.BlockSpec((1, S, E), lambda i: (i, 0, 0)),
            pl.BlockSpec((1, S, S), lambda i: (i, 0, 0)),
        ],
        compiler_params=pltpu.CompilerParams(
            dimension_semantics=("parallel",)),                # v7x: 2 TCs
    )(x, params["w_qkv"], params["b_qkv"], params["w_o"], params["b_o"])
    return out, aw


# ----------------------------------------------------------------------------
# Pure-JAX reference (mirrors nn.MultiheadAttention forward, eval mode,
# average_attn_weights=True) — used only to validate the kernel.
# ----------------------------------------------------------------------------
def mha_reference(x, w_qkv, b_qkv, w_o, b_o, n_heads):
    B, S, E = x.shape
    dh = E // n_heads
    qkv = jnp.einsum("bse,ef->bsf", x, w_qkv) + b_qkv
    q, k, v = jnp.split(qkv, 3, axis=-1)

    def heads(t):
        return t.reshape(B, S, n_heads, dh).transpose(0, 2, 1, 3)

    qh, kh, vh = heads(q), heads(k), heads(v)
    s = jnp.einsum("bhqd,bhkd->bhqk", qh, kh) / math.sqrt(dh)
    p = jax.nn.softmax(s, axis=-1)
    ctx = jnp.einsum("bhqk,bhkd->bhqd", p, vh)
    ctx = ctx.transpose(0, 2, 1, 3).reshape(B, S, E)
    out = jnp.einsum("bse,ef->bsf", ctx, w_o) + b_o
    aw = p.mean(axis=1)
    return out, aw


# ----------------------------------------------------------------------------
if __name__ == "__main__":
    EMBED, N_HEADS = 128, 4
    B, S = 2, 8

    key = jax.random.PRNGKey(0)
    k_x, k_w, k_b, k_wo, k_bo = jax.random.split(key, 5)
    x = jax.random.normal(k_x, (B, S, EMBED), jnp.float32)
    # Packed in_proj weights ([E, 3E] = Wq|Wk|Wv transposed), biases pre-shaped
    # to [1, N] so no reshape sits on the call path.
    params = {
        "w_qkv": 0.05 * jax.random.normal(k_w, (EMBED, 3 * EMBED), jnp.float32),
        "b_qkv": 0.01 * jax.random.normal(k_b, (1, 3 * EMBED), jnp.float32),
        "w_o": 0.05 * jax.random.normal(k_wo, (EMBED, EMBED), jnp.float32),
        "b_o": 0.01 * jax.random.normal(k_bo, (1, EMBED), jnp.float32),
    }

    fwd = jax.jit(functools.partial(self_attention, n_heads=N_HEADS))
    out, aw = fwd(x, params)
    jax.block_until_ready((out, aw))

    assert out.shape == (B, S, EMBED), out.shape
    assert aw.shape == (B, S, S), aw.shape
    assert out.dtype == jnp.float32 and aw.dtype == jnp.float32

    ref_out, ref_aw = mha_reference(x, params["w_qkv"], params["b_qkv"],
                                    params["w_o"], params["b_o"], N_HEADS)
    # approx reciprocal (EUP vrcp) introduces ~1e-3 relative deviation
    assert jnp.allclose(out, ref_out, rtol=2e-2, atol=2e-2)
    assert jnp.allclose(aw, ref_aw, rtol=2e-2, atol=2e-2)

    print("KERNEL_OK")
</pallas_src>

<mosaic_0001>
module attributes {stable_mosaic.version = 11 : i64} {
  func.func @_mha_kernel(%arg0: i32, %arg1: memref<1x8x128xf32, #tpu.memory_space<vmem>>, %arg2: memref<128x384xf32, #tpu.memory_space<vmem>>, %arg3: memref<1x384xf32, #tpu.memory_space<vmem>>, %arg4: memref<128x128xf32, #tpu.memory_space<vmem>>, %arg5: memref<1x128xf32, #tpu.memory_space<vmem>>, %arg6: memref<1x8x128xf32, #tpu.memory_space<vmem>>, %arg7: memref<1x8x8xf32, #tpu.memory_space<vmem>>) attributes {dimension_semantics = [#tpu.dimension_semantics<parallel>], iteration_bounds = array<i64: 2>, scalar_prefetch = 0 : i64, scratch_operands = 0 : i64, tpu.core_type = #tpu.core_type<tc>, window_params = [{transform_indices = @transform_0, window_bounds = array<i64: 1, 8, 128>}, {pipeline_mode = #tpu.pipeline_mode<synchronous>, transform_indices = @transform_1, window_bounds = array<i64: 128, 384>}, {pipeline_mode = #tpu.pipeline_mode<synchronous>, transform_indices = @transform_2, window_bounds = array<i64: 1, 384>}, {pipeline_mode = #tpu.pipeline_mode<synchronous>, transform_indices = @transform_3, window_bounds = array<i64: 128, 128>}, {pipeline_mode = #tpu.pipeline_mode<synchronous>, transform_indices = @transform_4, window_bounds = array<i64: 1, 128>}, {transform_indices = @transform_5, window_bounds = array<i64: 1, 8, 128>}, {transform_indices = @transform_6, window_bounds = array<i64: 1, 8, 8>}]} {
    %c0 = arith.constant 0 : index
    %c0_0 = arith.constant 0 : index
    %c0_1 = arith.constant 0 : index
    %0 = vector.load %arg1[%c0, %c0_0, %c0_1] : memref<1x8x128xf32, #tpu.memory_space<vmem>>, vector<1x8x128xf32>
    %1 = vector.shape_cast %0 : vector<1x8x128xf32> to vector<8x128xf32>
    %c0_2 = arith.constant 0 : index
    %c0_3 = arith.constant 0 : index
    %2 = vector.load %arg2[%c0_2, %c0_3] : memref<128x384xf32, #tpu.memory_space<vmem>>, vector<128x384xf32>
    %cst = arith.constant dense<0.000000e+00> : vector<8x384xf32>
    %3 = tpu.matmul %1, %2, %cst {dimension_numbers = #tpu.dot_dimension_numbers<[1], [0], [0], [1], [0, 0, 1, 1], [], []>} : vector<8x128xf32>, vector<128x384xf32>, vector<8x384xf32> -> vector<8x384xf32>
    %c0_4 = arith.constant 0 : index
    %c0_5 = arith.constant 0 : index
    %4 = vector.load %arg3[%c0_4, %c0_5] : memref<1x384xf32, #tpu.memory_space<vmem>>, vector<1x384xf32>
    %5 = vector.broadcast %4 : vector<1x384xf32> to vector<8x384xf32>
    %6 = arith.addf %3, %5 : vector<8x384xf32>
    %cst_6 = arith.constant 0.000000e+00 : f32
    %7 = vector.broadcast %cst_6 : f32 to vector<8x128xf32>
    %cst_7 = arith.constant 0.000000e+00 : f32
    %8 = vector.broadcast %cst_7 : f32 to vector<8x8xf32>
    %9 = vector.extract_strided_slice %6 {offsets = [0, 0], sizes = [8, 32], strides = [1, 1]} : vector<8x384xf32> to vector<8x32xf32>
    %10 = vector.extract_strided_slice %6 {offsets = [0, 128], sizes = [8, 32], strides = [1, 1]} : vector<8x384xf32> to vector<8x32xf32>
    %11 = vector.extract_strided_slice %6 {offsets = [0, 256], sizes = [8, 32], strides = [1, 1]} : vector<8x384xf32> to vector<8x32xf32>
    %cst_8 = arith.constant dense<0.000000e+00> : vector<8x8xf32>
    %12 = tpu.matmul %9, %10, %cst_8 {dimension_numbers = #tpu.dot_dimension_numbers<[1], [1], [0], [0], [0, 0, 1, 0], [], []>} : vector<8x32xf32>, vector<8x32xf32>, vector<8x8xf32> -> vector<8x8xf32>
    %cst_9 = arith.constant 0.176776692 : f32
    %13 = vector.broadcast %cst_9 : f32 to vector<8x8xf32>
    %14 = arith.mulf %12, %13 : vector<8x8xf32>
    %cst_10 = arith.constant dense<0xFF800000> : vector<8xf32>
    %15 = vector.multi_reduction <maximumf>, %14, %cst_10 [1] : vector<8x8xf32> to vector<8xf32>
    %16 = vector.shape_cast %15 : vector<8xf32> to vector<8x1xf32>
    %17 = vector.broadcast %16 : vector<8x1xf32> to vector<8x8xf32>
    %18 = arith.subf %14, %17 : vector<8x8xf32>
    %19 = math.exp %18 : vector<8x8xf32>
    %cst_11 = arith.constant dense<0.000000e+00> : vector<8xf32>
    %20 = vector.multi_reduction <add>, %19, %cst_11 [1] : vector<8x8xf32> to vector<8xf32>
    %21 = vector.shape_cast %20 : vector<8xf32> to vector<8x1xf32>
    %22 = tpu.reciprocal %21 {approx = true} : vector<8x1xf32> -> vector<8x1xf32>
    %23 = vector.broadcast %22 : vector<8x1xf32> to vector<8x8xf32>
    %24 = arith.mulf %19, %23 : vector<8x8xf32>
    %25 = arith.addf %8, %24 : vector<8x8xf32>
    %cst_12 = arith.constant dense<0.000000e+00> : vector<8x32xf32>
    %26 = tpu.matmul %24, %11, %cst_12 {dimension_numbers = #tpu.dot_dimension_numbers<[1], [0], [0], [1], [0, 0, 1, 1], [], []>} : vector<8x8xf32>, vector<8x32xf32>, vector<8x32xf32> -> vector<8x32xf32>
    %c0_13 = arith.constant 0 : index
    %c0_14 = arith.constant 0 : index
    %27 = vector.load %arg4[%c0_13, %c0_14] : memref<128x128xf32, #tpu.memory_space<vmem>>, vector<32x128xf32>
    %cst_15 = arith.constant dense<0.000000e+00> : vector<8x128xf32>
    %28 = tpu.matmul %26, %27, %cst_15 {dimension_numbers = #tpu.dot_dimension_numbers<[1], [0], [0], [1], [0, 0, 1, 1], [], []>} : vector<8x32xf32>, vector<32x128xf32>, vector<8x128xf32> -> vector<8x128xf32>
    %29 = arith.addf %7, %28 : vector<8x128xf32>
    %30 = vector.extract_strided_slice %6 {offsets = [0, 32], sizes = [8, 32], strides = [1, 1]} : vector<8x384xf32> to vector<8x32xf32>
    %31 = vector.extract_strided_slice %6 {offsets = [0, 160], sizes = [8, 32], strides = [1, 1]} : vector<8x384xf32> to vector<8x32xf32>
    %32 = vector.extract_strided_slice %6 {offsets = [0, 288], sizes = [8, 32], strides = [1, 1]} : vector<8x384xf32> to vector<8x32xf32>
    %cst_16 = arith.constant dense<0.000000e+00> : vector<8x8xf32>
    %33 = tpu.matmul %30, %31, %cst_16 {dimension_numbers = #tpu.dot_dimension_numbers<[1], [1], [0], [0], [0, 0, 1, 0], [], []>} : vector<8x32xf32>, vector<8x32xf32>, vector<8x8xf32> -> vector<8x8xf32>
    %cst_17 = arith.constant 0.176776692 : f32
    %34 = vector.broadcast %cst_17 : f32 to vector<8x8xf32>
    %35 = arith.mulf %33, %34 : vector<8x8xf32>
    %cst_18 = arith.constant dense<0xFF800000> : vector<8xf32>
    %36 = vector.multi_reduction <maximumf>, %35, %cst_18 [1] : vector<8x8xf32> to vector<8xf32>
    %37 = vector.shape_cast %36 : vector<8xf32> to vector<8x1xf32>
    %38 = vector.broadcast %37 : vector<8x1xf32> to vector<8x8xf32>
    %39 = arith.subf %35, %38 : vector<8x8xf32>
    %40 = math.exp %39 : vector<8x8xf32>
    %cst_19 = arith.constant dense<0.000000e+00> : vector<8xf32>
    %41 = vector.multi_reduction <add>, %40, %cst_19 [1] : vector<8x8xf32> to vector<8xf32>
    %42 = vector.shape_cast %41 : vector<8xf32> to vector<8x1xf32>
    %43 = tpu.reciprocal %42 {approx = true} : vector<8x1xf32> -> vector<8x1xf32>
    %44 = vector.broadcast %43 : vector<8x1xf32> to vector<8x8xf32>
    %45 = arith.mulf %40, %44 : vector<8x8xf32>
    %46 = arith.addf %25, %45 : vector<8x8xf32>
    %cst_20 = arith.constant dense<0.000000e+00> : vector<8x32xf32>
    %47 = tpu.matmul %45, %32, %cst_20 {dimension_numbers = #tpu.dot_dimension_numbers<[1], [0], [0], [1], [0, 0, 1, 1], [], []>} : vector<8x8xf32>, vector<8x32xf32>, vector<8x32xf32> -> vector<8x32xf32>
    %c32 = arith.constant 32 : index
    %c0_21 = arith.constant 0 : index
    %48 = vector.load %arg4[%c32, %c0_21] : memref<128x128xf32, #tpu.memory_space<vmem>>, vector<32x128xf32>
    %cst_22 = arith.constant dense<0.000000e+00> : vector<8x128xf32>
    %49 = tpu.matmul %47, %48, %cst_22 {dimension_numbers = #tpu.dot_dimension_numbers<[1], [0], [0], [1], [0, 0, 1, 1], [], []>} : vector<8x32xf32>, vector<32x128xf32>, vector<8x128xf32> -> vector<8x128xf32>
    %50 = arith.addf %29, %49 : vector<8x128xf32>
    %51 = vector.extract_strided_slice %6 {offsets = [0, 64], sizes = [8, 32], strides = [1, 1]} : vector<8x384xf32> to vector<8x32xf32>
    %52 = vector.extract_strided_slice %6 {offsets = [0, 192], sizes = [8, 32], strides = [1, 1]} : vector<8x384xf32> to vector<8x32xf32>
    %53 = vector.extract_strided_slice %6 {offsets = [0, 320], sizes = [8, 32], strides = [1, 1]} : vector<8x384xf32> to vector<8x32xf32>
    %cst_23 = arith.constant dense<0.000000e+00> : vector<8x8xf32>
    %54 = tpu.matmul %51, %52, %cst_23 {dimension_numbers = #tpu.dot_dimension_numbers<[1], [1], [0], [0], [0, 0, 1, 0], [], []>} : vector<8x32xf32>, vector<8x32xf32>, vector<8x8xf32> -> vector<8x8xf32>
    %cst_24 = arith.constant 0.176776692 : f32
    %55 = vector.broadcast %cst_24 : f32 to vector<8x8xf32>
    %56 = arith.mulf %54, %55 : vector<8x8xf32>
    %cst_25 = arith.constant dense<0xFF800000> : vector<8xf32>
    %57 = vector.multi_reduction <maximumf>, %56, %cst_25 [1] : vector<8x8xf32> to vector<8xf32>
    %58 = vector.shape_cast %57 : vector<8xf32> to vector<8x1xf32>
    %59 = vector.broadcast %58 : vector<8x1xf32> to vector<8x8xf32>
    %60 = arith.subf %56, %59 : vector<8x8xf32>
    %61 = math.exp %60 : vector<8x8xf32>
    %cst_26 = arith.constant dense<0.000000e+00> : vector<8xf32>
    %62 = vector.multi_reduction <add>, %61, %cst_26 [1] : vector<8x8xf32> to vector<8xf32>
    %63 = vector.shape_cast %62 : vector<8xf32> to vector<8x1xf32>
    %64 = tpu.reciprocal %63 {approx = true} : vector<8x1xf32> -> vector<8x1xf32>
    %65 = vector.broadcast %64 : vector<8x1xf32> to vector<8x8xf32>
    %66 = arith.mulf %61, %65 : vector<8x8xf32>
    %67 = arith.addf %46, %66 : vector<8x8xf32>
    %cst_27 = arith.constant dense<0.000000e+00> : vector<8x32xf32>
    %68 = tpu.matmul %66, %53, %cst_27 {dimension_numbers = #tpu.dot_dimension_numbers<[1], [0], [0], [1], [0, 0, 1, 1], [], []>} : vector<8x8xf32>, vector<8x32xf32>, vector<8x32xf32> -> vector<8x32xf32>
    %c64 = arith.constant 64 : index
    %c0_28 = arith.constant 0 : index
    %69 = vector.load %arg4[%c64, %c0_28] : memref<128x128xf32, #tpu.memory_space<vmem>>, vector<32x128xf32>
    %cst_29 = arith.constant dense<0.000000e+00> : vector<8x128xf32>
    %70 = tpu.matmul %68, %69, %cst_29 {dimension_numbers = #tpu.dot_dimension_numbers<[1], [0], [0], [1], [0, 0, 1, 1], [], []>} : vector<8x32xf32>, vector<32x128xf32>, vector<8x128xf32> -> vector<8x128xf32>
    %71 = arith.addf %50, %70 : vector<8x128xf32>
    %72 = vector.extract_strided_slice %6 {offsets = [0, 96], sizes = [8, 32], strides = [1, 1]} : vector<8x384xf32> to vector<8x32xf32>
    %73 = vector.extract_strided_slice %6 {offsets = [0, 224], sizes = [8, 32], strides = [1, 1]} : vector<8x384xf32> to vector<8x32xf32>
    %74 = vector.extract_strided_slice %6 {offsets = [0, 352], sizes = [8, 32], strides = [1, 1]} : vector<8x384xf32> to vector<8x32xf32>
    %cst_30 = arith.constant dense<0.000000e+00> : vector<8x8xf32>
    %75 = tpu.matmul %72, %73, %cst_30 {dimension_numbers = #tpu.dot_dimension_numbers<[1], [1], [0], [0], [0, 0, 1, 0], [], []>} : vector<8x32xf32>, vector<8x32xf32>, vector<8x8xf32> -> vector<8x8xf32>
    %cst_31 = arith.constant 0.176776692 : f32
    %76 = vector.broadcast %cst_31 : f32 to vector<8x8xf32>
    %77 = arith.mulf %75, %76 : vector<8x8xf32>
    %cst_32 = arith.constant dense<0xFF800000> : vector<8xf32>
    %78 = vector.multi_reduction <maximumf>, %77, %cst_32 [1] : vector<8x8xf32> to vector<8xf32>
    %79 = vector.shape_cast %78 : vector<8xf32> to vector<8x1xf32>
    %80 = vector.broadcast %79 : vector<8x1xf32> to vector<8x8xf32>
    %81 = arith.subf %77, %80 : vector<8x8xf32>
    %82 = math.exp %81 : vector<8x8xf32>
    %cst_33 = arith.constant dense<0.000000e+00> : vector<8xf32>
    %83 = vector.multi_reduction <add>, %82, %cst_33 [1] : vector<8x8xf32> to vector<8xf32>
    %84 = vector.shape_cast %83 : vector<8xf32> to vector<8x1xf32>
    %85 = tpu.reciprocal %84 {approx = true} : vector<8x1xf32> -> vector<8x1xf32>
    %86 = vector.broadcast %85 : vector<8x1xf32> to vector<8x8xf32>
    %87 = arith.mulf %82, %86 : vector<8x8xf32>
    %88 = arith.addf %67, %87 : vector<8x8xf32>
    %cst_34 = arith.constant dense<0.000000e+00> : vector<8x32xf32>
    %89 = tpu.matmul %87, %74, %cst_34 {dimension_numbers = #tpu.dot_dimension_numbers<[1], [0], [0], [1], [0, 0, 1, 1], [], []>} : vector<8x8xf32>, vector<8x32xf32>, vector<8x32xf32> -> vector<8x32xf32>
    %c96 = arith.constant 96 : index
    %c0_35 = arith.constant 0 : index
    %90 = vector.load %arg4[%c96, %c0_35] : memref<128x128xf32, #tpu.memory_space<vmem>>, vector<32x128xf32>
    %cst_36 = arith.constant dense<0.000000e+00> : vector<8x128xf32>
    %91 = tpu.matmul %89, %90, %cst_36 {dimension_numbers = #tpu.dot_dimension_numbers<[1], [0], [0], [1], [0, 0, 1, 1], [], []>} : vector<8x32xf32>, vector<32x128xf32>, vector<8x128xf32> -> vector<8x128xf32>
    %92 = arith.addf %71, %91 : vector<8x128xf32>
    %c0_37 = arith.constant 0 : index
    %c0_38 = arith.constant 0 : index
    %93 = vector.load %arg5[%c0_37, %c0_38] : memref<1x128xf32, #tpu.memory_space<vmem>>, vector<1x128xf32>
    %94 = vector.broadcast %93 : vector<1x128xf32> to vector<8x128xf32>
    %95 = arith.addf %92, %94 : vector<8x128xf32>
    %c0_39 = arith.constant 0 : index
    %c0_40 = arith.constant 0 : index
    %c0_41 = arith.constant 0 : index
    %96 = vector.load %arg6[%c0_39, %c0_40, %c0_41] : memref<1x8x128xf32, #tpu.memory_space<vmem>>, vector<1x8x128xf32>
    %97 = vector.shape_cast %96 : vector<1x8x128xf32> to vector<8x128xf32>
    %98 = vector.shape_cast %95 : vector<8x128xf32> to vector<1x8x128xf32>
    tpu.vector_store %arg6[%c0_39, %c0_40, %c0_41], %98 {strides = array<i32>} : memref<1x8x128xf32, #tpu.memory_space<vmem>>, vector<1x8x128xf32>,
    %cst_42 = arith.constant 2.500000e-01 : f32
    %99 = vector.broadcast %cst_42 : f32 to vector<8x8xf32>
    %100 = arith.mulf %88, %99 : vector<8x8xf32>
    %c0_43 = arith.constant 0 : index
    %c0_44 = arith.constant 0 : index
    %c0_45 = arith.constant 0 : index
    %101 = vector.load %arg7[%c0_43, %c0_44, %c0_45] : memref<1x8x8xf32, #tpu.memory_space<vmem>>, vector<1x8x8xf32>
    %102 = vector.shape_cast %101 : vector<1x8x8xf32> to vector<8x8xf32>
    %103 = vector.shape_cast %100 : vector<8x8xf32> to vector<1x8x8xf32>
    tpu.vector_store %arg7[%c0_43, %c0_44, %c0_45], %103 {strides = array<i32>} : memref<1x8x8xf32, #tpu.memory_space<vmem>>, vector<1x8x8xf32>,
    return
  }
  func.func @transform_0(%arg0: i32) -> (i32, i32, i32) {
    %c0_i32 = arith.constant 0 : i32
    %c0_i32_0 = arith.constant 0 : i32
    %c0_i32_1 = arith.constant 0 : i32
    return %arg0, %c0_i32, %c0_i32_0 : i32, i32, i32
  }
  func.func @transform_1(%arg0: i32) -> (i32, i32) {
    %c0_i32 = arith.constant 0 : i32
    %c0_i32_0 = arith.constant 0 : i32
    %c0_i32_1 = arith.constant 0 : i32
    return %c0_i32, %c0_i32_0 : i32, i32
  }
  func.func @transform_2(%arg0: i32) -> (i32, i32) {
    %c0_i32 = arith.constant 0 : i32
    %c0_i32_0 = arith.constant 0 : i32
    %c0_i32_1 = arith.constant 0 : i32
    return %c0_i32, %c0_i32_0 : i32, i32
  }
  func.func @transform_3(%arg0: i32) -> (i32, i32) {
    %c0_i32 = arith.constant 0 : i32
    %c0_i32_0 = arith.constant 0 : i32
    %c0_i32_1 = arith.constant 0 : i32
    return %c0_i32, %c0_i32_0 : i32, i32
  }
  func.func @transform_4(%arg0: i32) -> (i32, i32) {
    %c0_i32 = arith.constant 0 : i32
    %c0_i32_0 = arith.constant 0 : i32
    %c0_i32_1 = arith.constant 0 : i32
    return %c0_i32, %c0_i32_0 : i32, i32
  }
  func.func @transform_5(%arg0: i32) -> (i32, i32, i32) {
    %c0_i32 = arith.constant 0 : i32
    %c0_i32_0 = arith.constant 0 : i32
    %c0_i32_1 = arith.constant 0 : i32
    return %arg0, %c0_i32, %c0_i32_0 : i32, i32, i32
  }
  func.func @transform_6(%arg0: i32) -> (i32, i32, i32) {
    %c0_i32 = arith.constant 0 : i32
    %c0_i32_0 = arith.constant 0 : i32
    %c0_i32_1 = arith.constant 0 : i32
    return %arg0, %c0_i32, %c0_i32_0 : i32, i32, i32
  }
}

</mosaic_0001>

<llo_original>
// kernel: self_attention.1
$region0: #{self_attention.1}
  #allocation0 [shape = 'u32[]', space=smem, size = 0x4, offset = 0x4, fixed_abs, tag = 'smem constant byte address 0x4 - core index']
  #allocation1 [shape = 'u32[144,128]{1,0:T(1,128)}', space=vmem, size = 0x12000, scoped, tag = 'internal scratch']
  %s0 = inlined_call_operand.hbm [shape: f32[2,8,128], index: 0, kind: input, shape index: {}]
  %s1 = inlined_call_operand.hbm [shape: f32[128,384], index: 1, kind: input, shape index: {}]
  %s2 = inlined_call_operand.vmem [shape: f32[1,384], index: 2, kind: input, shape index: {}]
  %s3 = inlined_call_operand.hbm [shape: f32[128,128], index: 3, kind: input, shape index: {}]
  %s4 = inlined_call_operand.hbm [shape: f32[1,128], index: 4, kind: input, shape index: {}]
  %s5 = inlined_call_operand.hbm [shape: f32[2,8,128], index: 5, kind: output, shape index: {0}]
  %s6 = inlined_call_operand.hbm [shape: f32[2,8,8], index: 6, kind: output, shape index: {1}]
  %7 = xla_tuple %s5, %s6
  %s8 = sld [smem:[#allocation0]]
  $region77: #{self_attention.1} parent=0
    _
  %s10 = ssub.s32 1, %s8
  %s11 = scalar_select 0, %s10, %s8
  $region1: #{self_attention.1} parent=0
    #allocation2 [shape = 'u8[8192]{0}', space=vmem, size = 0x2000, scoped, tag = 'input window, operand 0']
    #allocation3 [shape = 's32[2]{0}', space=sflag, size = 0x8, scoped, tag = 'scoped memory for self_attention.1']
    #allocation4 [shape = 's32[2]{0}', space=sflag, size = 0x8, scoped, tag = 'scoped memory for self_attention.1']
    #allocation5 [shape = 'u8[196608]{0}', space=vmem, size = 0x30000, scoped, tag = 'input window, operand 1, single buffered']
    #allocation6 [shape = 's32[1]{0}', space=sflag, size = 0x4, scoped, tag = 'scoped memory for self_attention.1']
    #allocation7 [shape = 'u8[65536]{0}', space=vmem, size = 0x10000, scoped, tag = 'input window, operand 3, single buffered']
    #allocation8 [shape = 'u8[512]{0}', space=vmem, size = 0x400, scoped, tag = 'input window, operand 4, single buffered']
    #allocation9 [shape = 's32[1]{0}', space=sflag, size = 0x4, scoped, tag = 'scoped memory for self_attention.1']
    #allocation10 [shape = 'u8[8192]{0}', space=vmem, size = 0x2000, scoped, tag = 'output window, operand 0']
    #allocation11 [shape = 'u8[8192]{0}', space=vmem, size = 0x2000, scoped, tag = 'output window, operand 1']
    #allocation12 [shape = 's32[2]{0}', space=sflag, size = 0x8, scoped, tag = 'scoped memory for self_attention.1']
    %12 = vsyncpa [#allocation3], 0
    %s13 = scalar_lea.sflag [#allocation3], 1
    %14 = vsyncpa %s13, 0
    %15 = vsyncpa [#allocation6], 0
    %16 = vsyncpa [#allocation9], 0
    %17 = vsyncpa [#allocation4], 0
    %s18 = scalar_lea.sflag [#allocation4], 1
    %19 = vsyncpa %s18, 0
    %20 = vsyncpa [#allocation12], 0
    %s21 = scalar_lea.sflag [#allocation12], 1
    %22 = vsyncpa %s21, 0
    loop: start=0, step=1, limit=4
    $region2: #{self_attention.1} parent=1 // loop_pre_header
      _
    $region3: #{self_attention.1} parent=1 // loop_header
      %s24 = sphi 0, %s28
      %p25 = scmp.ge.s32.totalorder %s24, 4
      %s34 = sphi 0, %s36
      %s37 = sphi 0, %s34
      %s38 = sphi 0, %s37
      %s54 = sphi 0, %s38
      %s58 = sphi 0, %s58
      %s60 = sphi 0, %s58
      %s61 = sphi 0, %s60
      %s75 = sphi 0, %s61
      %s79 = sphi 0, %s79
      %s81 = sphi 0, %s79
      %s82 = sphi 0, %s81
      %s96 = sphi 0, %s82
      %s100 = sphi 0, %s100
      %s102 = sphi 0, %s100
      %s103 = sphi 0, %s102
      %s117 = sphi 0, %s103
      %s121 = sphi 0, %s121
      %s123 = sphi 0, %s121
      %s124 = sphi 0, %s123
      %s138 = sphi 0, %s124
      %s144 = sphi 0, %s146
      %s147 = sphi 0, %s144
      %s148 = sphi 0, %s147
      %s164 = sphi 0, %s148
      %s170 = sphi 0, %s172
      %s173 = sphi 0, %s170
      %s174 = sphi 0, %s173
      %s190 = sphi 0, %s174
    $region4: #{self_attention.1} parent=1 // loop_header_branch
      %27 = sbr.rel (%p25) target = $region8
    $region5: #{self_attention.1} parent=1 // loop_body
      %s29 = ssub.s32 %s24, 1
      %s30 = ssub.s32 %s24, 2
      %s31 = sadd.s32 %s24, 1
      %s32 = ssub.s32 %s24, %s31
      %p33 = scmp.eq.s32.totalorder %s32, 0
      %s35 = sadd.s32 %s34, 1
      %s36 = scalar_select %p33, %s34, %s35
      %p39 = pneg %p33
      %p40 = scmp.eq.s32.totalorder %s24, 1
      %p41 = por %p39, %p40
      %p42 = scmp.ne.s32.totalorder %s34, %s37
      %p43 = scmp.eq.s32.totalorder %s24, 0
      %p44 = por %p42, %p43
      %p45 = scmp.ne.s32.totalorder %s34, %s37
      %p46 = scmp.eq.s32.totalorder %s29, 1
      %p47 = por %p45, %p46
      %p48 = scmp.ne.s32.totalorder %s37, %s38
      %p49 = scmp.eq.s32.totalorder %s29, 0
      %p50 = por %p48, %p49
      %p51 = scmp.ne.s32.totalorder %s37, %s38
      %p52 = scmp.eq.s32.totalorder %s30, 1
      %p53 = por %p51, %p52
      %p55 = scmp.ne.s32.totalorder %s38, %s54
      %p56 = scmp.eq.s32.totalorder %s30, 0
      %p57 = por %p55, %p56
      %s59 = sadd.s32 %s58, 1
      %p62 = scmp.eq.s32.totalorder %s24, 1
      %p63 = scmp.ne.s32.totalorder %s58, %s60
      %p64 = scmp.eq.s32.totalorder %s24, 0
      %p65 = por %p63, %p64
      %p66 = scmp.ne.s32.totalorder %s58, %s60
      %p67 = scmp.eq.s32.totalorder %s29, 1
      %p68 = por %p66, %p67
      %p69 = scmp.ne.s32.totalorder %s60, %s61
      %p70 = scmp.eq.s32.totalorder %s29, 0
      %p71 = por %p69, %p70
      %p72 = scmp.ne.s32.totalorder %s60, %s61
      %p73 = scmp.eq.s32.totalorder %s30, 1
      %p74 = por %p72, %p73
      %p76 = scmp.ne.s32.totalorder %s61, %s75
      %p77 = scmp.eq.s32.totalorder %s30, 0
      %p78 = por %p76, %p77
      %s80 = sadd.s32 %s79, 1
      %p83 = scmp.eq.s32.totalorder %s24, 1
      %p84 = scmp.ne.s32.totalorder %s79, %s81
      %p85 = scmp.eq.s32.totalorder %s24, 0
      %p86 = por %p84, %p85
      %p87 = scmp.ne.s32.totalorder %s79, %s81
      %p88 = scmp.eq.s32.totalorder %s29, 1
      %p89 = por %p87, %p88
      %p90 = scmp.ne.s32.totalorder %s81, %s82
      %p91 = scmp.eq.s32.totalorder %s29, 0
      %p92 = por %p90, %p91
      %p93 = scmp.ne.s32.totalorder %s81, %s82
      %p94 = scmp.eq.s32.totalorder %s30, 1
      %p95 = por %p93, %p94
      %p97 = scmp.ne.s32.totalorder %s82, %s96
      %p98 = scmp.eq.s32.totalorder %s30, 0
      %p99 = por %p97, %p98
      %s101 = sadd.s32 %s100, 1
      %p104 = scmp.eq.s32.totalorder %s24, 1
      %p105 = scmp.ne.s32.totalorder %s100, %s102
      %p106 = scmp.eq.s32.totalorder %s24, 0
      %p107 = por %p105, %p106
      %p108 = scmp.ne.s32.totalorder %s100, %s102
      %p109 = scmp.eq.s32.totalorder %s29, 1
      %p110 = por %p108, %p109
      %p111 = scmp.ne.s32.totalorder %s102, %s103
      %p112 = scmp.eq.s32.totalorder %s29, 0
      %p113 = por %p111, %p112
      %p114 = scmp.ne.s32.totalorder %s102, %s103
      %p115 = scmp.eq.s32.totalorder %s30, 1
      %p116 = por %p114, %p115
      %p118 = scmp.ne.s32.totalorder %s103, %s117
      %p119 = scmp.eq.s32.totalorder %s30, 0
      %p120 = por %p118, %p119
      %s122 = sadd.s32 %s121, 1
      %p125 = scmp.eq.s32.totalorder %s24, 1
      %p126 = scmp.ne.s32.totalorder %s121, %s123
      %p127 = scmp.eq.s32.totalorder %s24, 0
      %p128 = por %p126, %p127
      %p129 = scmp.ne.s32.totalorder %s121, %s123
      %p130 = scmp.eq.s32.totalorder %s29, 1
      %p131 = por %p129, %p130
      %p132 = scmp.ne.s32.totalorder %s123, %s124
      %p133 = scmp.eq.s32.totalorder %s29, 0
      %p134 = por %p132, %p133
      %p135 = scmp.ne.s32.totalorder %s123, %s124
      %p136 = scmp.eq.s32.totalorder %s30, 1
      %p137 = por %p135, %p136
      %p139 = scmp.ne.s32.totalorder %s124, %s138
      %p140 = scmp.eq.s32.totalorder %s30, 0
      %p141 = por %p139, %p140
      %s142 = ssub.s32 %s24, %s31
      %p143 = scmp.eq.s32.totalorder %s142, 0
      %s145 = sadd.s32 %s144, 1
      %s146 = scalar_select %p143, %s144, %s145
      %p149 = pneg %p143
      %p150 = scmp.eq.s32.totalorder %s24, 1
      %p151 = por %p149, %p150
      %p152 = scmp.ne.s32.totalorder %s144, %s147
      %p153 = scmp.eq.s32.totalorder %s24, 0
      %p154 = por %p152, %p153
      %p155 = scmp.ne.s32.totalorder %s144, %s147
      %p156 = scmp.eq.s32.totalorder %s29, 1
      %p157 = por %p155, %p156
      %p158 = scmp.ne.s32.totalorder %s147, %s148
      %p159 = scmp.eq.s32.totalorder %s29, 0
      %p160 = por %p158, %p159
      %p161 = scmp.ne.s32.totalorder %s147, %s148
      %p162 = scmp.eq.s32.totalorder %s30, 1
      %p163 = por %p161, %p162
      %p165 = scmp.ne.s32.totalorder %s148, %s164
      %p166 = scmp.eq.s32.totalorder %s30, 0
      %p167 = por %p165, %p166
      %s168 = ssub.s32 %s24, %s31
      %p169 = scmp.eq.s32.totalorder %s168, 0
      %s171 = sadd.s32 %s170, 1
      %s172 = scalar_select %p169, %s170, %s171
      %p175 = pneg %p169
      %p176 = scmp.eq.s32.totalorder %s24, 1
      %p177 = por %p175, %p176
      %p178 = scmp.ne.s32.totalorder %s170, %s173
      %p179 = scmp.eq.s32.totalorder %s24, 0
      %p180 = por %p178, %p179
      %p181 = scmp.ne.s32.totalorder %s170, %s173
      %p182 = scmp.eq.s32.totalorder %s29, 1
      %p183 = por %p181, %p182
      %p184 = scmp.ne.s32.totalorder %s173, %s174
      %p185 = scmp.eq.s32.totalorder %s29, 0
      %p186 = por %p184, %p185
      %p187 = scmp.ne.s32.totalorder %s173, %s174
      %p188 = scmp.eq.s32.totalorder %s30, 1
      %p189 = por %p187, %p188
      %p191 = scmp.ne.s32.totalorder %s174, %s190
      %p192 = scmp.eq.s32.totalorder %s30, 0
      %p193 = por %p191, %p192
      %p194 = scmp.le.s32.totalorder 1, %s24
      %p195 = scmp.lt.s32.totalorder %s24, 3
      %p196 = pnand %p194, %p195
      %p197 = pneg %p196
      // Predicated region
      $region9: #{self_attention.1} parent=5 // pred_check
        _
      $region10: #{self_attention.1} parent=5 // pred_check_branch
        %199 = sbr.rel (%p196) target = $region12
      $region11: #{self_attention.1} parent=5 // pred_region
        %s200 = ssub.s32 %s24, 1
        // Predicated region
        $region13: #{self_attention.1} parent=11 // pred_check
          %p201 = pneg %p71
        $region14: #{self_attention.1} parent=11 // pred_check_branch
          %203 = sbr.rel (%p201) target = $region16
        $region15: #{self_attention.1} parent=11 // pred_region
          %s205 = ssub.s32 6144, 6144
          %206 = vsyncadd [#allocation6], %s205
          %s207 = sshll.u32 [#allocation5], 4
          %s208 = int_to_ptr.vmem [resolvable:$true] %s207
          %213 = dma.hbm_to_vmem [thread:$0]  %s1, 6144, %s208, [#allocation6], 384, 384, 24
        $region16: #{self_attention.1} parent=11 // pred_fallthru
          _
        // Predicated region
        $region17: #{self_attention.1} parent=11 // pred_check
          %p214 = pneg %p92
        $region18: #{self_attention.1} parent=11 // pred_check_branch
          %216 = sbr.rel (%p214) target = $region20
        $region19: #{self_attention.1} parent=11 // pred_region
          _
        $region20: #{self_attention.1} parent=11 // pred_fallthru
          _
        // Predicated region
        $region21: #{self_attention.1} parent=11 // pred_check
          %p217 = pneg %p113
        $region22: #{self_attention.1} parent=11 // pred_check_branch
          %219 = sbr.rel (%p217) target = $region24
        $region23: #{self_attention.1} parent=11 // pred_region
          %s221 = ssub.s32 2048, 2048
          %222 = vsyncadd [#allocation6], %s221
          %s223 = sshll.u32 [#allocation7], 4
          %s224 = int_to_ptr.vmem [resolvable:$true] %s223
          %229 = dma.hbm_to_vmem [thread:$0]  %s3, 2048, %s224, [#allocation6], 128, 128, 8
        $region24: #{self_attention.1} parent=11 // pred_fallthru
          _
        // Predicated region
        $region25: #{self_attention.1} parent=11 // pred_check
          %p230 = pneg %p134
        $region26: #{self_attention.1} parent=11 // pred_check_branch
          %232 = sbr.rel (%p230) target = $region28
        $region27: #{self_attention.1} parent=11 // pred_region
          %s234 = ssub.s32 16, 16
          %235 = vsyncadd [#allocation9], %s234
          %s237 = sshll.u32 [#allocation8], 4
          %s238 = int_to_ptr.vmem [resolvable:$true] %s237
          %240 = dma.hbm_to_vmem [thread:$0]  %s4, 16, %s238, [#allocation9]
        $region28: #{self_attention.1} parent=11 // pred_fallthru
          _
      $region12: #{self_attention.1} parent=5 // pred_fallthru
        _
      %p241 = scmp.lt.s32.totalorder %s24, 2
      // Predicated region
      $region29: #{self_attention.1} parent=5 // pred_check
        %p242 = pneg %p241
      $region30: #{self_attention.1} parent=5 // pred_check_branch
        %244 = sbr.rel (%p242) target = $region32
      $region31: #{self_attention.1} parent=5 // pred_region
        // Predicated region
        $region33: #{self_attention.1} parent=31 // pred_check
          %p245 = pneg %p44
        $region34: #{self_attention.1} parent=31 // pred_check_branch
          %247 = sbr.rel (%p245) target = $region36
        $region35: #{self_attention.1} parent=31 // pred_region
          %s248 = sand.u32 %s34, 1
          %s249 = scalar_lea.sflag [#allocation3], %s248
          %s250 = sand.u32 %s34, 1
          %s251 = smul.addr %s250, 8
          %s252 = scalar_lea.vmem [#allocation2], %s251
          %s254 = ssub.s32 128, 128
          %255 = vsyncadd %s249, %s254
          %s256 = smul.addr %s24, 128
          %s257 = scalar_lea.hbm %s0, %s256
          %s259 = sshll.u32 %s252, 4
          %s260 = int_to_ptr.vmem [resolvable:$true] %s259
          %262 = dma.hbm_to_vmem [thread:$0]  %s257, 128, %s260, %s249
        $region36: #{self_attention.1} parent=31 // pred_fallthru
          _
      $region32: #{self_attention.1} parent=5 // pred_fallthru
        _
      %p263 = scmp.le.s32.totalorder 1, %s24
      %p264 = scmp.lt.s32.totalorder %s24, 3
      %p265 = pnand %p263, %p264
      %p266 = pneg %p265
      // Predicated region
      $region37: #{self_attention.1} parent=5 // pred_check
        _
      $region38: #{self_attention.1} parent=5 // pred_check_branch
        %268 = sbr.rel (%p265) target = $region40
      $region39: #{self_attention.1} parent=5 // pred_region
        %s269 = ssub.s32 %s24, 1
        %s270 = sand.u32 %s37, 1
        %s271 = scalar_lea.sflag [#allocation3], %s270
        %s272 = sand.u32 %s37, 1
        %s273 = smul.addr %s272, 8
        %s274 = scalar_lea.vmem [#allocation2], %s273
        // Predicated region
        $region41: #{self_attention.1} parent=39 // pred_check
          %p275 = pneg %p50
        $region42: #{self_attention.1} parent=39 // pred_check_branch
          %277 = sbr.rel (%p275) target = $region44
        $region43: #{self_attention.1} parent=39 // pred_region
          %278 = dma.done %s271, 128
        $region44: #{self_attention.1} parent=39 // pred_fallthru
          _
        // Predicated region
        $region45: #{self_attention.1} parent=39 // pred_check
          %p279 = pneg %p71
        $region46: #{self_attention.1} parent=39 // pred_check_branch
          %281 = sbr.rel (%p279) target = $region48
        $region47: #{self_attention.1} parent=39 // pred_region
          %282 = dma.done [#allocation6], 6144
        $region48: #{self_attention.1} parent=39 // pred_fallthru
          _
        // Predicated region
        $region49: #{self_attention.1} parent=39 // pred_check
          %p283 = pneg %p113
        $region50: #{self_attention.1} parent=39 // pred_check_branch
          %285 = sbr.rel (%p283) target = $region52
        $region51: #{self_attention.1} parent=39 // pred_region
          %286 = dma.done [#allocation6], 2048
        $region52: #{self_attention.1} parent=39 // pred_fallthru
          _
        // Predicated region
        $region53: #{self_attention.1} parent=39 // pred_check
          %p287 = pneg %p134
        $region54: #{self_attention.1} parent=39 // pred_check_branch
          %289 = sbr.rel (%p287) target = $region56
        $region55: #{self_attention.1} parent=39 // pred_region
          %290 = dma.done [#allocation9], 16
        $region56: #{self_attention.1} parent=39 // pred_fallthru
          _
        %s291 = sand.u32 %s37, 1
        %s292 = scalar_lea.sflag [#allocation3], %s291
        %s293 = sand.u32 %s37, 1
        %s294 = smul.addr %s293, 8
        %s295 = scalar_lea.vmem [#allocation2], %s294
        %p296 = pneg %p50
        %p297 = pneg %p47
        %p298 = pneg %p71
        %p299 = pneg %p68
        %p300 = pneg %p92
        %p301 = pneg %p89
        %p302 = pneg %p113
        %p303 = pneg %p110
        %p304 = pneg %p134
        %p305 = pneg %p131
        %p306 = pneg %p160
        %p307 = pneg %p157
        %s308 = sand.u32 %s147, 1
        %s309 = scalar_lea.sflag [#allocation4], %s308
        %s310 = sand.u32 %s147, 1
        %s311 = smul.addr %s310, 8
        %s312 = scalar_lea.vmem [#allocation10], %s311
        %p313 = pneg %p186
        %p314 = pneg %p183
        %s315 = sand.u32 %s173, 1
        %s316 = scalar_lea.sflag [#allocation12], %s315
        %s317 = sand.u32 %s173, 1
        %s318 = smul.addr %s317, 8
        %s319 = scalar_lea.vmem [#allocation11], %s318
        %v320 = vld [vmem:[%s274] sm:$0xff]
        %v321 = vld [vmem:[#allocation5] sm:$0xff]
        %v322 = vld [vmem:[#allocation5 + $0x8] sm:$0xff]
        %v323 = vld [vmem:[#allocation5 + $0x10] sm:$0xff]
        %v324 = vld [vmem:[#allocation5 + $0x18] sm:$0xff]
        %v325 = vld [vmem:[#allocation5 + $0x20] sm:$0xff]
        %v326 = vld [vmem:[#allocation5 + $0x28] sm:$0xff]
        %v327 = vld [vmem:[#allocation5 + $0x30] sm:$0xff]
        %v328 = vld [vmem:[#allocation5 + $0x38] sm:$0xff]
        %v329 = vld [vmem:[#allocation5 + $0x40] sm:$0xff]
        %v330 = vld [vmem:[#allocation5 + $0x48] sm:$0xff]
        %v331 = vld [vmem:[#allocation5 + $0x50] sm:$0xff]
        %v332 = vld [vmem:[#allocation5 + $0x58] sm:$0xff]
        %v333 = vld [vmem:[#allocation5 + $0x60] sm:$0xff]
        %v334 = vld [vmem:[#allocation5 + $0x68] sm:$0xff]
        %v335 = vld [vmem:[#allocation5 + $0x70] sm:$0xff]
        %v336 = vld [vmem:[#allocation5 + $0x78] sm:$0xff]
        %v337 = vld [vmem:[#allocation5 + $0x80] sm:$0xff]
        %v338 = vld [vmem:[#allocation5 + $0x88] sm:$0xff]
        %v339 = vld [vmem:[#allocation5 + $0x90] sm:$0xff]
        %v340 = vld [vmem:[#allocation5 + $0x98] sm:$0xff]
        %v341 = vld [vmem:[#allocation5 + $0xa0] sm:$0xff]
        %v342 = vld [vmem:[#allocation5 + $0xa8] sm:$0xff]
        %v343 = vld [vmem:[#allocation5 + $0xb0] sm:$0xff]
        %v344 = vld [vmem:[#allocation5 + $0xb8] sm:$0xff]
        %v345 = vld [vmem:[#allocation5 + $0xc0] sm:$0xff]
        %v346 = vld [vmem:[#allocation5 + $0xc8] sm:$0xff]
        %v347 = vld [vmem:[#allocation5 + $0xd0] sm:$0xff]
        %v348 = vld [vmem:[#allocation5 + $0xd8] sm:$0xff]
        %v349 = vld [vmem:[#allocation5 + $0xe0] sm:$0xff]
        %v350 = vld [vmem:[#allocation5 + $0xe8] sm:$0xff]
        %v351 = vld [vmem:[#allocation5 + $0xf0] sm:$0xff]
        %v352 = vld [vmem:[#allocation5 + $0xf8] sm:$0xff]
        %v353 = vld [vmem:[#allocation5 + $0x100] sm:$0xff]
        %v354 = vld [vmem:[#allocation5 + $0x108] sm:$0xff]
        %v355 = vld [vmem:[#allocation5 + $0x110] sm:$0xff]
        %v356 = vld [vmem:[#allocation5 + $0x118] sm:$0xff]
        %v357 = vld [vmem:[#allocation5 + $0x120] sm:$0xff]
        %v358 = vld [vmem:[#allocation5 + $0x128] sm:$0xff]
        %v359 = vld [vmem:[#allocation5 + $0x130] sm:$0xff]
        %v360 = vld [vmem:[#allocation5 + $0x138] sm:$0xff]
        %v361 = vld [vmem:[#allocation5 + $0x140] sm:$0xff]
        %v362 = vld [vmem:[#allocation5 + $0x148] sm:$0xff]
        %v363 = vld [vmem:[#allocation5 + $0x150] sm:$0xff]
        %v364 = vld [vmem:[#allocation5 + $0x158] sm:$0xff]
        %v365 = vld [vmem:[#allocation5 + $0x160] sm:$0xff]
        %v366 = vld [vmem:[#allocation5 + $0x168] sm:$0xff]
        %v367 = vld [vmem:[#allocation5 + $0x170] sm:$0xff]
        %v368 = vld [vmem:[#allocation5 + $0x178] sm:$0xff]
        %v369 = vld [vmem:[%s2] sm:$0x7]
        %v371 = vlaneseq
        %v372 = vshrl.u32 %v371, 7
        %v373 = vsub.s32 0, %v372
        %v374 = vrot.slane %v369, %v373
        %v375 = vlaneseq
        %v376 = vshrl.u32 %v375, 7
        %v377 = vsub.s32 1, %v376
        %v378 = vrot.slane %v369, %v377
        %v379 = vlaneseq
        %v380 = vshrl.u32 %v379, 7
        %v381 = vsub.s32 2, %v380
        %v382 = vrot.slane %v369, %v381
        %386 = vmatprep.subr.mxu0 %v367
        %387 = vmatpush1.msra.mxu0 %v366
        %388 = vmatprep.subr.mxu0 %v364
        %389 = vmatpush1.msra.mxu0 %v363
        %390 = vmatprep.subr.mxu0 %v361
        %391 = vmatpush1.msra.mxu0 %v360
        %392 = vmatprep.subr.mxu0 %v358
        %393 = vmatpush1.msra.mxu0 %v357
        %394 = vmatprep.subr.mxu0 %v355
        %395 = vmatpush1.msra.mxu0 %v354
        %396 = vmatprep.subr.mxu0 %v352
        %397 = vmatpush1.msra.mxu0 %v351
        %398 = vmatprep.subr.mxu0 %v349
        %399 = vmatpush1.msra.mxu0 %v348
        %400 = vmatprep.subr.mxu0 %v346
        %401 = vmatpush1.msra.mxu0 %v345
        %402 = vmatprep.subr.mxu0 %v343
        %403 = vmatpush1.msra.mxu0 %v342
        %404 = vmatprep.subr.mxu0 %v340
        %405 = vmatpush1.msra.mxu0 %v339
        %406 = vmatprep.subr.mxu0 %v337
        %407 = vmatpush1.msra.mxu0 %v336
        %408 = vmatprep.subr.mxu0 %v334
        %409 = vmatpush1.msra.mxu0 %v333
        %410 = vmatprep.subr.mxu0 %v331
        %411 = vmatpush1.msra.mxu0 %v330
        %412 = vmatprep.subr.mxu0 %v328
        %413 = vmatpush1.msra.mxu0 %v327
        %414 = vmatprep.subr.mxu0 %v325
        %415 = vmatpush1.msra.mxu0 %v324
        %416 = vmatprep.subr.mxu0 %v322
        %417 = vmatpush1.msra.mxu0 %v321
        %418 = vmatprep.subr.mxu0 0.0
        %419 = vmatpush2.msra.mxu0 0.0
        %420 = vmatprep.subr.mxu0 0.0
        %421 = vmatpush2.msra.mxu0 0.0
        %422 = vmatprep.subr.mxu0 0.0
        %423 = vmatpush2.msra.mxu0 0.0
        %424 = vmatprep.subr.mxu0 0.0
        %425 = vmatpush2.msra.mxu0 0.0
        %426 = vmatprep.subr.mxu0 0.0
        %427 = vmatpush2.msra.mxu0 0.0
        %428 = vmatprep.subr.mxu0 0.0
        %429 = vmatpush2.msra.mxu0 0.0
        %430 = vmatprep.subr.mxu0 0.0
        %431 = vmatpush2.msra.mxu0 0.0
        %432 = vmatprep.subr.mxu0 0.0
        %433 = vmatpush2.msra.mxu0 0.0
        %434 = vmatprep.subr.mxu0 0.0
        %435 = vmatpush2.msra.mxu0 0.0
        %436 = vmatprep.subr.mxu0 0.0
        %437 = vmatpush2.msra.mxu0 0.0
        %438 = vmatprep.subr.mxu0 0.0
        %439 = vmatpush2.msra.mxu0 0.0
        %440 = vmatprep.subr.mxu0 0.0
        %441 = vmatpush2.msra.mxu0 0.0
        %442 = vmatprep.subr.mxu0 0.0
        %443 = vmatpush2.msra.mxu0 0.0
        %444 = vmatprep.subr.mxu0 0.0
        %445 = vmatpush2.msra.mxu0 0.0
        %446 = vmatprep.subr.mxu0 0.0
        %447 = vmatpush2.msra.mxu0 0.0
        %448 = vmatprep.subr.mxu0 0.0
        %449 = vmatpush2.msra.mxu0 0.0
        %450 = vmatprep.mubr.f32.mxu0 0.0
        %451 = vmatmul.mubr.f32.gmra.mxu0 %v320
        %v452 = vpop.f32.mrf.mxu0
        %v453 = vadd.f32 %v374, %v452
        %v454 = vpop.f32.mrf.mxu0
        %v455 = vadd.f32 %v378, %v454
        %456 = vdwg.mxu0
        %457 = vmatprep.subr.mxu0 0.0
        %458 = vmatpush1.msra.mxu0 %v368
        %459 = vmatprep.subr.mxu0 0.0
        %460 = vmatpush1.msra.mxu0 %v365
        %461 = vmatprep.subr.mxu0 0.0
        %462 = vmatpush1.msra.mxu0 %v362
        %463 = vmatprep.subr.mxu0 0.0
        %464 = vmatpush1.msra.mxu0 %v359
        %465 = vmatprep.subr.mxu0 0.0
        %466 = vmatpush1.msra.mxu0 %v356
        %467 = vmatprep.subr.mxu0 0.0
        %468 = vmatpush1.msra.mxu0 %v353
        %469 = vmatprep.subr.mxu0 0.0
        %470 = vmatpush1.msra.mxu0 %v350
        %471 = vmatprep.subr.mxu0 0.0
        %472 = vmatpush1.msra.mxu0 %v347
        %473 = vmatprep.subr.mxu0 0.0
        %474 = vmatpush1.msra.mxu0 %v344
        %475 = vmatprep.subr.mxu0 0.0
        %476 = vmatpush1.msra.mxu0 %v341
        %477 = vmatprep.subr.mxu0 0.0
        %478 = vmatpush1.msra.mxu0 %v338
        %479 = vmatprep.subr.mxu0 0.0
        %480 = vmatpush1.msra.mxu0 %v335
        %481 = vmatprep.subr.mxu0 0.0
        %482 = vmatpush1.msra.mxu0 %v332
        %483 = vmatprep.subr.mxu0 0.0
        %484 = vmatpush1.msra.mxu0 %v329
        %485 = vmatprep.subr.mxu0 0.0
        %486 = vmatpush1.msra.mxu0 %v326
        %487 = vmatprep.subr.mxu0 0.0
        %488 = vmatpush1.msra.mxu0 %v323
        %489 = vmatprep.subr.mxu0 0.0
        %490 = vmatpush2.msra.mxu0 0.0
        %491 = vmatprep.subr.mxu0 0.0
        %492 = vmatpush2.msra.mxu0 0.0
        %493 = vmatprep.subr.mxu0 0.0
        %494 = vmatpush2.msra.mxu0 0.0
        %495 = vmatprep.subr.mxu0 0.0
        %496 = vmatpush2.msra.mxu0 0.0
        %497 = vmatprep.subr.mxu0 0.0
        %498 = vmatpush2.msra.mxu0 0.0
        %499 = vmatprep.subr.mxu0 0.0
        %500 = vmatpush2.msra.mxu0 0.0
        %501 = vmatprep.subr.mxu0 0.0
        %502 = vmatpush2.msra.mxu0 0.0
        %503 = vmatprep.subr.mxu0 0.0
        %504 = vmatpush2.msra.mxu0 0.0
        %505 = vmatprep.subr.mxu0 0.0
        %506 = vmatpush2.msra.mxu0 0.0
        %507 = vmatprep.subr.mxu0 0.0
        %508 = vmatpush2.msra.mxu0 0.0
        %509 = vmatprep.subr.mxu0 0.0
        %510 = vmatpush2.msra.mxu0 0.0
        %511 = vmatprep.subr.mxu0 0.0
        %512 = vmatpush2.msra.mxu0 0.0
        %513 = vmatprep.subr.mxu0 0.0
        %514 = vmatpush2.msra.mxu0 0.0
        %515 = vmatprep.subr.mxu0 0.0
        %516 = vmatpush2.msra.mxu0 0.0
        %517 = vmatprep.subr.mxu0 0.0
        %518 = vmatpush2.msra.mxu0 0.0
        %519 = vmatprep.subr.mxu0 0.0
        %520 = vmatpush2.msra.mxu0 0.0
        %521 = vmatprep.mubr.f32.mxu0 0.0
        %522 = vmatmul.mubr.f32.gmra.mxu0 %v320
        %v523 = vpop.f32.mrf.mxu0
        %v524 = vadd.f32 %v382, %v523
        %v525 = vpop.f32.mrf.mxu0
        %526 = vdwg.mxu0
        %vm527 = vcmask 261120
        %v529 = vsel %vm527, %v453, 0
        %v532 = vsel %vm527, %v455, 0
        %534 = vmatprep.subr.mxu0 0.0
        %535 = vmatpush1.xpose.msra.mxu0 0.0
        %536 = vmatprep.subr.mxu0 0.0
        %537 = vmatpush1.xpose.msra.mxu0 0.0
        %538 = vmatprep.subr.mxu0 0.0
        %539 = vmatpush1.xpose.msra.mxu0 0.0
        %540 = vmatprep.subr.mxu0 0.0
        %541 = vmatpush1.xpose.msra.mxu0 0.0
        %542 = vmatprep.subr.mxu0 0.0
        %543 = vmatpush1.xpose.msra.mxu0 0.0
        %544 = vmatprep.subr.mxu0 0.0
        %545 = vmatpush1.xpose.msra.mxu0 0.0
        %546 = vmatprep.subr.mxu0 0.0
        %547 = vmatpush1.xpose.msra.mxu0 0.0
        %548 = vmatprep.subr.mxu0 0.0
        %549 = vmatpush1.xpose.msra.mxu0 0.0
        %550 = vmatprep.subr.mxu0 0.0
        %551 = vmatpush1.xpose.msra.mxu0 0.0
        %552 = vmatprep.subr.mxu0 0.0
        %553 = vmatpush1.xpose.msra.mxu0 0.0
        %554 = vmatprep.subr.mxu0 0.0
        %555 = vmatpush1.xpose.msra.mxu0 0.0
        %556 = vmatprep.subr.mxu0 0.0
        %557 = vmatpush1.xpose.msra.mxu0 0.0
        %558 = vmatprep.subr.mxu0 0.0
        %559 = vmatpush1.xpose.msra.mxu0 0.0
        %560 = vmatprep.subr.mxu0 0.0
        %561 = vmatpush1.xpose.msra.mxu0 0.0
        %562 = vmatprep.subr.mxu0 0.0
        %563 = vmatpush1.xpose.msra.mxu0 0.0
        %564 = vmatprep.subr.mxu0 0.0
        %565 = vmatpush1.xpose.msra.mxu0 %v532
        %566 = vmatprep.subr.mxu0 0.0
        %567 = vmatpush2.xpose.msra.mxu0 0.0
        %568 = vmatprep.subr.mxu0 0.0
        %569 = vmatpush2.xpose.msra.mxu0 0.0
        %570 = vmatprep.subr.mxu0 0.0
        %571 = vmatpush2.xpose.msra.mxu0 0.0
        %572 = vmatprep.subr.mxu0 0.0
        %573 = vmatpush2.xpose.msra.mxu0 0.0
        %574 = vmatprep.subr.mxu0 0.0
        %575 = vmatpush2.xpose.msra.mxu0 0.0
        %576 = vmatprep.subr.mxu0 0.0
        %577 = vmatpush2.xpose.msra.mxu0 0.0
        %578 = vmatprep.subr.mxu0 0.0
        %579 = vmatpush2.xpose.msra.mxu0 0.0
        %580 = vmatprep.subr.mxu0 0.0
        %581 = vmatpush2.xpose.msra.mxu0 0.0
        %582 = vmatprep.subr.mxu0 0.0
        %583 = vmatpush2.xpose.msra.mxu0 0.0
        %584 = vmatprep.subr.mxu0 0.0
        %585 = vmatpush2.xpose.msra.mxu0 0.0
        %586 = vmatprep.subr.mxu0 0.0
        %587 = vmatpush2.xpose.msra.mxu0 0.0
        %588 = vmatprep.subr.mxu0 0.0
        %589 = vmatpush2.xpose.msra.mxu0 0.0
        %590 = vmatprep.subr.mxu0 0.0
        %591 = vmatpush2.xpose.msra.mxu0 0.0
        %592 = vmatprep.subr.mxu0 0.0
        %593 = vmatpush2.xpose.msra.mxu0 0.0
        %594 = vmatprep.subr.mxu0 0.0
        %595 = vmatpush2.xpose.msra.mxu0 0.0
        %596 = vmatprep.subr.mxu0 0.0
        %597 = vmatpush2.xpose.msra.mxu0 0.0
        %598 = vmatprep.mubr.f32.mxu0 0.0
        %599 = vmatmul.mubr.f32.gmra.mxu0 %v529
        %v600 = vpop.f32.mrf.mxu0
        %v601 = vadd.f32 0.0, %v600
        %v602 = vpop.f32.mrf.mxu0
        %603 = vdwg.mxu0
        %v604 = vmul.f32 %v601, 0.17677669
        %vm605 = vcmask 64512
        %v606 = vsel %vm605, %v604, -inf
        %607 = vmax.xlane.f32.xlu0 %v606
        %v608 = vpop.xlane.xlu0 %607
        %v609 = vsub.f32 %v604, %v608
        %v610 = vmul.f32 %v609, 1.442695
        %v611 = vpow.pop %v610
        %v612 = vsel %vm605, %v611, 0.0
        %613 = vadd.xlane.f32.xlu0 %v612
        %v614 = vpop.xlane.xlu0 %613
        %v615 = vrcp.pop %v614
        %v616 = vmul.f32 %v611, %v615
        %v617 = vadd.f32 %v616, 0.0
        %v619 = vsel %vm605, %v616, 0
        %621 = vmatprep.subr.mxu0 0.0
        %622 = vmatpush1.msra.mxu0 0.0
        %623 = vmatprep.subr.mxu0 0.0
        %624 = vmatpush1.msra.mxu0 0.0
        %625 = vmatprep.subr.mxu0 0.0
        %626 = vmatpush1.msra.mxu0 0.0
        %627 = vmatprep.subr.mxu0 0.0
        %628 = vmatpush1.msra.mxu0 0.0
        %629 = vmatprep.subr.mxu0 0.0
        %630 = vmatpush1.msra.mxu0 0.0
        %631 = vmatprep.subr.mxu0 0.0
        %632 = vmatpush1.msra.mxu0 0.0
        %633 = vmatprep.subr.mxu0 0.0
        %634 = vmatpush1.msra.mxu0 0.0
        %635 = vmatprep.subr.mxu0 0.0
        %636 = vmatpush1.msra.mxu0 0.0
        %637 = vmatprep.subr.mxu0 0.0
        %638 = vmatpush1.msra.mxu0 0.0
        %639 = vmatprep.subr.mxu0 0.0
        %640 = vmatpush1.msra.mxu0 0.0
        %641 = vmatprep.subr.mxu0 0.0
        %642 = vmatpush1.msra.mxu0 0.0
        %643 = vmatprep.subr.mxu0 0.0
        %644 = vmatpush1.msra.mxu0 0.0
        %645 = vmatprep.subr.mxu0 0.0
        %646 = vmatpush1.msra.mxu0 0.0
        %647 = vmatprep.subr.mxu0 0.0
        %648 = vmatpush1.msra.mxu0 0.0
        %649 = vmatprep.subr.mxu0 0.0
        %650 = vmatpush1.msra.mxu0 0.0
        %651 = vmatprep.subr.mxu0 0.0
        %652 = vmatpush1.msra.mxu0 %v524
        %653 = vmatprep.subr.mxu0 0.0
        %654 = vmatpush2.msra.mxu0 0.0
        %655 = vmatprep.subr.mxu0 0.0
        %656 = vmatpush2.msra.mxu0 0.0
        %657 = vmatprep.subr.mxu0 0.0
        %658 = vmatpush2.msra.mxu0 0.0
        %659 = vmatprep.subr.mxu0 0.0
        %660 = vmatpush2.msra.mxu0 0.0
        %661 = vmatprep.subr.mxu0 0.0
        %662 = vmatpush2.msra.mxu0 0.0
        %663 = vmatprep.subr.mxu0 0.0
        %664 = vmatpush2.msra.mxu0 0.0
        %665 = vmatprep.subr.mxu0 0.0
        %666 = vmatpush2.msra.mxu0 0.0
        %667 = vmatprep.subr.mxu0 0.0
        %668 = vmatpush2.msra.mxu0 0.0
        %669 = vmatprep.subr.mxu0 0.0
        %670 = vmatpush2.msra.mxu0 0.0
        %671 = vmatprep.subr.mxu0 0.0
        %672 = vmatpush2.msra.mxu0 0.0
        %673 = vmatprep.subr.mxu0 0.0
        %674 = vmatpush2.msra.mxu0 0.0
        %675 = vmatprep.subr.mxu0 0.0
        %676 = vmatpush2.msra.mxu0 0.0
        %677 = vmatprep.subr.mxu0 0.0
        %678 = vmatpush2.msra.mxu0 0.0
        %679 = vmatprep.subr.mxu0 0.0
        %680 = vmatpush2.msra.mxu0 0.0
        %681 = vmatprep.subr.mxu0 0.0
        %682 = vmatpush2.msra.mxu0 0.0
        %683 = vmatprep.subr.mxu0 0.0
        %684 = vmatpush2.msra.mxu0 0.0
        %685 = vmatprep.mubr.f32.mxu0 0.0
        %686 = vmatmul.mubr.f32.gmra.mxu0 %v619
        %v687 = vpop.f32.mrf.mxu0
        %v688 = vadd.f32 0.0, %v687
        %v689 = vpop.f32.mrf.mxu0
        %690 = vdwg.mxu0
        %v691 = vld [vmem:[#allocation7] sm:$0xff]
        %v692 = vld [vmem:[#allocation7 + $0x8] sm:$0xff]
        %v693 = vld [vmem:[#allocation7 + $0x10] sm:$0xff]
        %v694 = vld [vmem:[#allocation7 + $0x18] sm:$0xff]
        %695 = vrot.lane.b32.xlu0 %v453, 96
        %v696 = vpop.permute.xlu0 %695
        %697 = vrot.lane.b32.xlu0 %v455, 96
        %v698 = vpop.permute.xlu0 %697
        %v699 = vsel %vm527, %v696, 0
        %v701 = vsel %vm527, %v698, 0
        %703 = vmatprep.subr.mxu0 0.0
        %704 = vmatpush1.xpose.msra.mxu0 0.0
        %705 = vmatprep.subr.mxu0 0.0
        %706 = vmatpush1.xpose.msra.mxu0 0.0
        %707 = vmatprep.subr.mxu0 0.0
        %708 = vmatpush1.xpose.msra.mxu0 0.0
        %709 = vmatprep.subr.mxu0 0.0
        %710 = vmatpush1.xpose.msra.mxu0 0.0
        %711 = vmatprep.subr.mxu0 0.0
        %712 = vmatpush1.xpose.msra.mxu0 0.0
        %713 = vmatprep.subr.mxu0 0.0
        %714 = vmatpush1.xpose.msra.mxu0 0.0
        %715 = vmatprep.subr.mxu0 0.0
        %716 = vmatpush1.xpose.msra.mxu0 0.0
        %717 = vmatprep.subr.mxu0 0.0
        %718 = vmatpush1.xpose.msra.mxu0 0.0
        %719 = vmatprep.subr.mxu0 0.0
        %720 = vmatpush1.xpose.msra.mxu0 0.0
        %721 = vmatprep.subr.mxu0 0.0
        %722 = vmatpush1.xpose.msra.mxu0 0.0
        %723 = vmatprep.subr.mxu0 0.0
        %724 = vmatpush1.xpose.msra.mxu0 0.0
        %725 = vmatprep.subr.mxu0 0.0
        %726 = vmatpush1.xpose.msra.mxu0 0.0
        %727 = vmatprep.subr.mxu0 0.0
        %728 = vmatpush1.xpose.msra.mxu0 0.0
        %729 = vmatprep.subr.mxu0 0.0
        %730 = vmatpush1.xpose.msra.mxu0 0.0
        %731 = vmatprep.subr.mxu0 0.0
        %732 = vmatpush1.xpose.msra.mxu0 0.0
        %733 = vmatprep.subr.mxu0 0.0
        %734 = vmatpush1.xpose.msra.mxu0 %v701
        %735 = vmatprep.subr.mxu0 0.0
        %736 = vmatpush2.xpose.msra.mxu0 0.0
        %737 = vmatprep.subr.mxu0 0.0
        %738 = vmatpush2.xpose.msra.mxu0 0.0
        %739 = vmatprep.subr.mxu0 0.0
        %740 = vmatpush2.xpose.msra.mxu0 0.0
        %741 = vmatprep.subr.mxu0 0.0
        %742 = vmatpush2.xpose.msra.mxu0 0.0
        %743 = vmatprep.subr.mxu0 0.0
        %744 = vmatpush2.xpose.msra.mxu0 0.0
        %745 = vmatprep.subr.mxu0 0.0
        %746 = vmatpush2.xpose.msra.mxu0 0.0
        %747 = vmatprep.subr.mxu0 0.0
        %748 = vmatpush2.xpose.msra.mxu0 0.0
        %749 = vmatprep.subr.mxu0 0.0
        %750 = vmatpush2.xpose.msra.mxu0 0.0
        %751 = vmatprep.subr.mxu0 0.0
        %752 = vmatpush2.xpose.msra.mxu0 0.0
        %753 = vmatprep.subr.mxu0 0.0
        %754 = vmatpush2.xpose.msra.mxu0 0.0
        %755 = vmatprep.subr.mxu0 0.0
        %756 = vmatpush2.xpose.msra.mxu0 0.0
        %757 = vmatprep.subr.mxu0 0.0
        %758 = vmatpush2.xpose.msra.mxu0 0.0
        %759 = vmatprep.subr.mxu0 0.0
        %760 = vmatpush2.xpose.msra.mxu0 0.0
        %761 = vmatprep.subr.mxu0 0.0
        %762 = vmatpush2.xpose.msra.mxu0 0.0
        %763 = vmatprep.subr.mxu0 0.0
        %764 = vmatpush2.xpose.msra.mxu0 0.0
        %765 = vmatprep.subr.mxu0 0.0
        %766 = vmatpush2.xpose.msra.mxu0 0.0
        %767 = vmatprep.mubr.f32.mxu0 0.0
        %768 = vmatmul.mubr.f32.gmra.mxu0 %v699
        %v769 = vpop.f32.mrf.mxu0
        %v770 = vadd.f32 0.0, %v769
        %v771 = vpop.f32.mrf.mxu0
        %772 = vdwg.mxu0
        %v773 = vmul.f32 %v770, 0.17677669
        %v774 = vsel %vm605, %v773, -inf
        %775 = vmax.xlane.f32.xlu0 %v774
        %v776 = vpop.xlane.xlu0 %775
        %v777 = vsub.f32 %v773, %v776
        %v778 = vmul.f32 %v777, 1.442695
        %v779 = vpow.pop %v778
        %v780 = vsel %vm605, %v779, 0.0
        %781 = vadd.xlane.f32.xlu0 %v780
        %v782 = vpop.xlane.xlu0 %781
        %v783 = vrcp.pop %v782
        %v784 = vmul.f32 %v779, %v783
        %v785 = vadd.f32 %v617, %v784
        %787 = vrot.lane.b32.xlu0 %v524, 96
        %v788 = vpop.permute.xlu0 %787
        %v791 = vsel %vm605, %v784, 0
        %793 = vmatprep.subr.mxu0 0.0
        %794 = vmatpush1.msra.mxu0 0.0
        %795 = vmatprep.subr.mxu0 0.0
        %796 = vmatpush1.msra.mxu0 0.0
        %797 = vmatprep.subr.mxu0 0.0
        %798 = vmatpush1.msra.mxu0 0.0
        %799 = vmatprep.subr.mxu0 0.0
        %800 = vmatpush1.msra.mxu0 0.0
        %801 = vmatprep.subr.mxu0 0.0
        %802 = vmatpush1.msra.mxu0 0.0
        %803 = vmatprep.subr.mxu0 0.0
        %804 = vmatpush1.msra.mxu0 0.0
        %805 = vmatprep.subr.mxu0 0.0
        %806 = vmatpush1.msra.mxu0 0.0
        %807 = vmatprep.subr.mxu0 0.0
        %808 = vmatpush1.msra.mxu0 0.0
        %809 = vmatprep.subr.mxu0 0.0
        %810 = vmatpush1.msra.mxu0 0.0
        %811 = vmatprep.subr.mxu0 0.0
        %812 = vmatpush1.msra.mxu0 0.0
        %813 = vmatprep.subr.mxu0 0.0
        %814 = vmatpush1.msra.mxu0 0.0
        %815 = vmatprep.subr.mxu0 0.0
        %816 = vmatpush1.msra.mxu0 0.0
        %817 = vmatprep.subr.mxu0 0.0
        %818 = vmatpush1.msra.mxu0 0.0
        %819 = vmatprep.subr.mxu0 0.0
        %820 = vmatpush1.msra.mxu0 0.0
        %821 = vmatprep.subr.mxu0 0.0
        %822 = vmatpush1.msra.mxu0 0.0
        %823 = vmatprep.subr.mxu0 0.0
        %824 = vmatpush1.msra.mxu0 %v788
        %825 = vmatprep.subr.mxu0 0.0
        %826 = vmatpush2.msra.mxu0 0.0
        %827 = vmatprep.subr.mxu0 0.0
        %828 = vmatpush2.msra.mxu0 0.0
        %829 = vmatprep.subr.mxu0 0.0
        %830 = vmatpush2.msra.mxu0 0.0
        %831 = vmatprep.subr.mxu0 0.0
        %832 = vmatpush2.msra.mxu0 0.0
        %833 = vmatprep.subr.mxu0 0.0
        %834 = vmatpush2.msra.mxu0 0.0
        %835 = vmatprep.subr.mxu0 0.0
        %836 = vmatpush2.msra.mxu0 0.0
        %837 = vmatprep.subr.mxu0 0.0
        %838 = vmatpush2.msra.mxu0 0.0
        %839 = vmatprep.subr.mxu0 0.0
        %840 = vmatpush2.msra.mxu0 0.0
        %841 = vmatprep.subr.mxu0 0.0
        %842 = vmatpush2.msra.mxu0 0.0
        %843 = vmatprep.subr.mxu0 0.0
        %844 = vmatpush2.msra.mxu0 0.0
        %845 = vmatprep.subr.mxu0 0.0
        %846 = vmatpush2.msra.mxu0 0.0
        %847 = vmatprep.subr.mxu0 0.0
        %848 = vmatpush2.msra.mxu0 0.0
        %849 = vmatprep.subr.mxu0 0.0
        %850 = vmatpush2.msra.mxu0 0.0
        %851 = vmatprep.subr.mxu0 0.0
        %852 = vmatpush2.msra.mxu0 0.0
        %853 = vmatprep.subr.mxu0 0.0
        %854 = vmatpush2.msra.mxu0 0.0
        %855 = vmatprep.subr.mxu0 0.0
        %856 = vmatpush2.msra.mxu0 0.0
        %857 = vmatprep.mubr.f32.mxu0 0.0
        %858 = vmatmul.mubr.f32.gmra.mxu0 %v791
        %v859 = vpop.f32.mrf.mxu0
        %v860 = vadd.f32 0.0, %v859
        %v861 = vpop.f32.mrf.mxu0
        %862 = vdwg.mxu0
        %v863 = vld [vmem:[#allocation7 + $0x20] sm:$0xff]
        %v864 = vld [vmem:[#allocation7 + $0x28] sm:$0xff]
        %v865 = vld [vmem:[#allocation7 + $0x30] sm:$0xff]
        %v866 = vld [vmem:[#allocation7 + $0x38] sm:$0xff]
        %v868 = vsel %vm527, %v860, 0
        %870 = vmatprep.subr.mxu0 0.0
        %871 = vmatpush1.msra.mxu0 0.0
        %872 = vmatprep.subr.mxu0 0.0
        %873 = vmatpush1.msra.mxu0 0.0
        %874 = vmatprep.subr.mxu0 0.0
        %875 = vmatpush1.msra.mxu0 0.0
        %876 = vmatprep.subr.mxu0 0.0
        %877 = vmatpush1.msra.mxu0 0.0
        %878 = vmatprep.subr.mxu0 0.0
        %879 = vmatpush1.msra.mxu0 0.0
        %880 = vmatprep.subr.mxu0 0.0
        %881 = vmatpush1.msra.mxu0 0.0
        %882 = vmatprep.subr.mxu0 0.0
        %883 = vmatpush1.msra.mxu0 0.0
        %884 = vmatprep.subr.mxu0 0.0
        %885 = vmatpush1.msra.mxu0 0.0
        %886 = vmatprep.subr.mxu0 0.0
        %887 = vmatpush1.msra.mxu0 0.0
        %888 = vmatprep.subr.mxu0 0.0
        %889 = vmatpush1.msra.mxu0 0.0
        %890 = vmatprep.subr.mxu0 0.0
        %891 = vmatpush1.msra.mxu0 0.0
        %892 = vmatprep.subr.mxu0 0.0
        %893 = vmatpush1.msra.mxu0 0.0
        %894 = vmatprep.subr.mxu0 0.0
        %895 = vmatpush1.msra.mxu0 %v866
        %896 = vmatprep.subr.mxu0 0.0
        %897 = vmatpush1.msra.mxu0 %v865
        %898 = vmatprep.subr.mxu0 0.0
        %899 = vmatpush1.msra.mxu0 %v864
        %900 = vmatprep.subr.mxu0 0.0
        %901 = vmatpush1.msra.mxu0 %v863
        %902 = vmatprep.subr.mxu0 0.0
        %903 = vmatpush2.msra.mxu0 0.0
        %904 = vmatprep.subr.mxu0 0.0
        %905 = vmatpush2.msra.mxu0 0.0
        %906 = vmatprep.subr.mxu0 0.0
        %907 = vmatpush2.msra.mxu0 0.0
        %908 = vmatprep.subr.mxu0 0.0
        %909 = vmatpush2.msra.mxu0 0.0
        %910 = vmatprep.subr.mxu0 0.0
        %911 = vmatpush2.msra.mxu0 0.0
        %912 = vmatprep.subr.mxu0 0.0
        %913 = vmatpush2.msra.mxu0 0.0
        %914 = vmatprep.subr.mxu0 0.0
        %915 = vmatpush2.msra.mxu0 0.0
        %916 = vmatprep.subr.mxu0 0.0
        %917 = vmatpush2.msra.mxu0 0.0
        %918 = vmatprep.subr.mxu0 0.0
        %919 = vmatpush2.msra.mxu0 0.0
        %920 = vmatprep.subr.mxu0 0.0
        %921 = vmatpush2.msra.mxu0 0.0
        %922 = vmatprep.subr.mxu0 0.0
        %923 = vmatpush2.msra.mxu0 0.0
        %924 = vmatprep.subr.mxu0 0.0
        %925 = vmatpush2.msra.mxu0 0.0
        %926 = vmatprep.subr.mxu0 0.0
        %927 = vmatpush2.msra.mxu0 0.0
        %928 = vmatprep.subr.mxu0 0.0
        %929 = vmatpush2.msra.mxu0 0.0
        %930 = vmatprep.subr.mxu0 0.0
        %931 = vmatpush2.msra.mxu0 0.0
        %932 = vmatprep.subr.mxu0 0.0
        %933 = vmatpush2.msra.mxu0 0.0
        %934 = vmatprep.mubr.f32.mxu0 0.0
        %935 = vmatmul.mubr.f32.gmra.mxu0 %v868
        %v936 = vpop.f32.mrf.mxu0
        %v937 = vadd.f32 0.0, %v936
        %v938 = vpop.f32.mrf.mxu0
        %939 = vdwg.mxu0
        %v941 = vsel %vm527, %v688, 0
        %943 = vmatprep.subr.mxu0 0.0
        %944 = vmatpush1.msra.mxu0 0.0
        %945 = vmatprep.subr.mxu0 0.0
        %946 = vmatpush1.msra.mxu0 0.0
        %947 = vmatprep.subr.mxu0 0.0
        %948 = vmatpush1.msra.mxu0 0.0
        %949 = vmatprep.subr.mxu0 0.0
        %950 = vmatpush1.msra.mxu0 0.0
        %951 = vmatprep.subr.mxu0 0.0
        %952 = vmatpush1.msra.mxu0 0.0
        %953 = vmatprep.subr.mxu0 0.0
        %954 = vmatpush1.msra.mxu0 0.0
        %955 = vmatprep.subr.mxu0 0.0
        %956 = vmatpush1.msra.mxu0 0.0
        %957 = vmatprep.subr.mxu0 0.0
        %958 = vmatpush1.msra.mxu0 0.0
        %959 = vmatprep.subr.mxu0 0.0
        %960 = vmatpush1.msra.mxu0 0.0
        %961 = vmatprep.subr.mxu0 0.0
        %962 = vmatpush1.msra.mxu0 0.0
        %963 = vmatprep.subr.mxu0 0.0
        %964 = vmatpush1.msra.mxu0 0.0
        %965 = vmatprep.subr.mxu0 0.0
        %966 = vmatpush1.msra.mxu0 0.0
        %967 = vmatprep.subr.mxu0 0.0
        %968 = vmatpush1.msra.mxu0 %v694
        %969 = vmatprep.subr.mxu0 0.0
        %970 = vmatpush1.msra.mxu0 %v693
        %971 = vmatprep.subr.mxu0 0.0
        %972 = vmatpush1.msra.mxu0 %v692
        %973 = vmatprep.subr.mxu0 0.0
        %974 = vmatpush1.msra.mxu0 %v691
        %975 = vmatprep.subr.mxu0 0.0
        %976 = vmatpush2.msra.mxu0 0.0
        %977 = vmatprep.subr.mxu0 0.0
        %978 = vmatpush2.msra.mxu0 0.0
        %979 = vmatprep.subr.mxu0 0.0
        %980 = vmatpush2.msra.mxu0 0.0
        %981 = vmatprep.subr.mxu0 0.0
        %982 = vmatpush2.msra.mxu0 0.0
        %983 = vmatprep.subr.mxu0 0.0
        %984 = vmatpush2.msra.mxu0 0.0
        %985 = vmatprep.subr.mxu0 0.0
        %986 = vmatpush2.msra.mxu0 0.0
        %987 = vmatprep.subr.mxu0 0.0
        %988 = vmatpush2.msra.mxu0 0.0
        %989 = vmatprep.subr.mxu0 0.0
        %990 = vmatpush2.msra.mxu0 0.0
        %991 = vmatprep.subr.mxu0 0.0
        %992 = vmatpush2.msra.mxu0 0.0
        %993 = vmatprep.subr.mxu0 0.0
        %994 = vmatpush2.msra.mxu0 0.0
        %995 = vmatprep.subr.mxu0 0.0
        %996 = vmatpush2.msra.mxu0 0.0
        %997 = vmatprep.subr.mxu0 0.0
        %998 = vmatpush2.msra.mxu0 0.0
        %999 = vmatprep.subr.mxu0 0.0
        %1000 = vmatpush2.msra.mxu0 0.0
        %1001 = vmatprep.subr.mxu0 0.0
        %1002 = vmatpush2.msra.mxu0 0.0
        %1003 = vmatprep.subr.mxu0 0.0
        %1004 = vmatpush2.msra.mxu0 0.0
        %1005 = vmatprep.subr.mxu0 0.0
        %1006 = vmatpush2.msra.mxu0 0.0
        %1007 = vmatprep.mubr.f32.mxu0 0.0
        %1008 = vmatmul.mubr.f32.gmra.mxu0 %v941
        %v1009 = vpop.f32.mrf.mxu0
        %v1010 = vadd.f32 %v937, %v1009
        %v1011 = vpop.f32.mrf.mxu0
        %1012 = vdwg.mxu0
        %1013 = vrot.lane.b32.xlu0 %v453, 64
        %v1014 = vpop.permute.xlu0 %1013
        %1015 = vrot.lane.b32.xlu0 %v455, 64
        %v1016 = vpop.permute.xlu0 %1015
        %v1017 = vsel %vm527, %v1014, 0
        %v1019 = vsel %vm527, %v1016, 0
        %1021 = vmatprep.subr.mxu0 0.0
        %1022 = vmatpush1.xpose.msra.mxu0 0.0
        %1023 = vmatprep.subr.mxu0 0.0
        %1024 = vmatpush1.xpose.msra.mxu0 0.0
        %1025 = vmatprep.subr.mxu0 0.0
        %1026 = vmatpush1.xpose.msra.mxu0 0.0
        %1027 = vmatprep.subr.mxu0 0.0
        %1028 = vmatpush1.xpose.msra.mxu0 0.0
        %1029 = vmatprep.subr.mxu0 0.0
        %1030 = vmatpush1.xpose.msra.mxu0 0.0
        %1031 = vmatprep.subr.mxu0 0.0
        %1032 = vmatpush1.xpose.msra.mxu0 0.0
        %1033 = vmatprep.subr.mxu0 0.0
        %1034 = vmatpush1.xpose.msra.mxu0 0.0
        %1035 = vmatprep.subr.mxu0 0.0
        %1036 = vmatpush1.xpose.msra.mxu0 0.0
        %1037 = vmatprep.subr.mxu0 0.0
        %1038 = vmatpush1.xpose.msra.mxu0 0.0
        %1039 = vmatprep.subr.mxu0 0.0
        %1040 = vmatpush1.xpose.msra.mxu0 0.0
        %1041 = vmatprep.subr.mxu0 0.0
        %1042 = vmatpush1.xpose.msra.mxu0 0.0
        %1043 = vmatprep.subr.mxu0 0.0
        %1044 = vmatpush1.xpose.msra.mxu0 0.0
        %1045 = vmatprep.subr.mxu0 0.0
        %1046 = vmatpush1.xpose.msra.mxu0 0.0
        %1047 = vmatprep.subr.mxu0 0.0
        %1048 = vmatpush1.xpose.msra.mxu0 0.0
        %1049 = vmatprep.subr.mxu0 0.0
        %1050 = vmatpush1.xpose.msra.mxu0 0.0
        %1051 = vmatprep.subr.mxu0 0.0
        %1052 = vmatpush1.xpose.msra.mxu0 %v1019
        %1053 = vmatprep.subr.mxu0 0.0
        %1054 = vmatpush2.xpose.msra.mxu0 0.0
        %1055 = vmatprep.subr.mxu0 0.0
        %1056 = vmatpush2.xpose.msra.mxu0 0.0
        %1057 = vmatprep.subr.mxu0 0.0
        %1058 = vmatpush2.xpose.msra.mxu0 0.0
        %1059 = vmatprep.subr.mxu0 0.0
        %1060 = vmatpush2.xpose.msra.mxu0 0.0
        %1061 = vmatprep.subr.mxu0 0.0
        %1062 = vmatpush2.xpose.msra.mxu0 0.0
        %1063 = vmatprep.subr.mxu0 0.0
        %1064 = vmatpush2.xpose.msra.mxu0 0.0
        %1065 = vmatprep.subr.mxu0 0.0
        %1066 = vmatpush2.xpose.msra.mxu0 0.0
        %1067 = vmatprep.subr.mxu0 0.0
        %1068 = vmatpush2.xpose.msra.mxu0 0.0
        %1069 = vmatprep.subr.mxu0 0.0
        %1070 = vmatpush2.xpose.msra.mxu0 0.0
        %1071 = vmatprep.subr.mxu0 0.0
        %1072 = vmatpush2.xpose.msra.mxu0 0.0
        %1073 = vmatprep.subr.mxu0 0.0
        %1074 = vmatpush2.xpose.msra.mxu0 0.0
        %1075 = vmatprep.subr.mxu0 0.0
        %1076 = vmatpush2.xpose.msra.mxu0 0.0
        %1077 = vmatprep.subr.mxu0 0.0
        %1078 = vmatpush2.xpose.msra.mxu0 0.0
        %1079 = vmatprep.subr.mxu0 0.0
        %1080 = vmatpush2.xpose.msra.mxu0 0.0
        %1081 = vmatprep.subr.mxu0 0.0
        %1082 = vmatpush2.xpose.msra.mxu0 0.0
        %1083 = vmatprep.subr.mxu0 0.0
        %1084 = vmatpush2.xpose.msra.mxu0 0.0
        %1085 = vmatprep.mubr.f32.mxu0 0.0
        %1086 = vmatmul.mubr.f32.gmra.mxu0 %v1017
        %v1087 = vpop.f32.mrf.mxu0
        %v1088 = vadd.f32 0.0, %v1087
        %v1089 = vpop.f32.mrf.mxu0
        %1090 = vdwg.mxu0
        %v1091 = vmul.f32 %v1088, 0.17677669
        %v1092 = vsel %vm605, %v1091, -inf
        %1093 = vmax.xlane.f32.xlu0 %v1092
        %v1094 = vpop.xlane.xlu0 %1093
        %v1095 = vsub.f32 %v1091, %v1094
        %v1096 = vmul.f32 %v1095, 1.442695
        %v1097 = vpow.pop %v1096
        %v1098 = vsel %vm605, %v1097, 0.0
        %1099 = vadd.xlane.f32.xlu0 %v1098
        %v1100 = vpop.xlane.xlu0 %1099
        %v1101 = vrcp.pop %v1100
        %v1102 = vmul.f32 %v1097, %v1101
        %v1103 = vadd.f32 %v785, %v1102
        %1104 = vrot.lane.b32.xlu0 %v524, 64
        %v1105 = vpop.permute.xlu0 %1104
        %v1108 = vsel %vm605, %v1102, 0
        %1110 = vmatprep.subr.mxu0 0.0
        %1111 = vmatpush1.msra.mxu0 0.0
        %1112 = vmatprep.subr.mxu0 0.0
        %1113 = vmatpush1.msra.mxu0 0.0
        %1114 = vmatprep.subr.mxu0 0.0
        %1115 = vmatpush1.msra.mxu0 0.0
        %1116 = vmatprep.subr.mxu0 0.0
        %1117 = vmatpush1.msra.mxu0 0.0
        %1118 = vmatprep.subr.mxu0 0.0
        %1119 = vmatpush1.msra.mxu0 0.0
        %1120 = vmatprep.subr.mxu0 0.0
        %1121 = vmatpush1.msra.mxu0 0.0
        %1122 = vmatprep.subr.mxu0 0.0
        %1123 = vmatpush1.msra.mxu0 0.0
        %1124 = vmatprep.subr.mxu0 0.0
        %1125 = vmatpush1.msra.mxu0 0.0
        %1126 = vmatprep.subr.mxu0 0.0
        %1127 = vmatpush1.msra.mxu0 0.0
        %1128 = vmatprep.subr.mxu0 0.0
        %1129 = vmatpush1.msra.mxu0 0.0
        %1130 = vmatprep.subr.mxu0 0.0
        %1131 = vmatpush1.msra.mxu0 0.0
        %1132 = vmatprep.subr.mxu0 0.0
        %1133 = vmatpush1.msra.mxu0 0.0
        %1134 = vmatprep.subr.mxu0 0.0
        %1135 = vmatpush1.msra.mxu0 0.0
        %1136 = vmatprep.subr.mxu0 0.0
        %1137 = vmatpush1.msra.mxu0 0.0
        %1138 = vmatprep.subr.mxu0 0.0
        %1139 = vmatpush1.msra.mxu0 0.0
        %1140 = vmatprep.subr.mxu0 0.0
        %1141 = vmatpush1.msra.mxu0 %v1105
        %1142 = vmatprep.subr.mxu0 0.0
        %1143 = vmatpush2.msra.mxu0 0.0
        %1144 = vmatprep.subr.mxu0 0.0
        %1145 = vmatpush2.msra.mxu0 0.0
        %1146 = vmatprep.subr.mxu0 0.0
        %1147 = vmatpush2.msra.mxu0 0.0
        %1148 = vmatprep.subr.mxu0 0.0
        %1149 = vmatpush2.msra.mxu0 0.0
        %1150 = vmatprep.subr.mxu0 0.0
        %1151 = vmatpush2.msra.mxu0 0.0
        %1152 = vmatprep.subr.mxu0 0.0
        %1153 = vmatpush2.msra.mxu0 0.0
        %1154 = vmatprep.subr.mxu0 0.0
        %1155 = vmatpush2.msra.mxu0 0.0
        %1156 = vmatprep.subr.mxu0 0.0
        %1157 = vmatpush2.msra.mxu0 0.0
        %1158 = vmatprep.subr.mxu0 0.0
        %1159 = vmatpush2.msra.mxu0 0.0
        %1160 = vmatprep.subr.mxu0 0.0
        %1161 = vmatpush2.msra.mxu0 0.0
        %1162 = vmatprep.subr.mxu0 0.0
        %1163 = vmatpush2.msra.mxu0 0.0
        %1164 = vmatprep.subr.mxu0 0.0
        %1165 = vmatpush2.msra.mxu0 0.0
        %1166 = vmatprep.subr.mxu0 0.0
        %1167 = vmatpush2.msra.mxu0 0.0
        %1168 = vmatprep.subr.mxu0 0.0
        %1169 = vmatpush2.msra.mxu0 0.0
        %1170 = vmatprep.subr.mxu0 0.0
        %1171 = vmatpush2.msra.mxu0 0.0
        %1172 = vmatprep.subr.mxu0 0.0
        %1173 = vmatpush2.msra.mxu0 0.0
        %1174 = vmatprep.mubr.f32.mxu0 0.0
        %1175 = vmatmul.mubr.f32.gmra.mxu0 %v1108
        %v1176 = vpop.f32.mrf.mxu0
        %v1177 = vadd.f32 0.0, %v1176
        %v1178 = vpop.f32.mrf.mxu0
        %1179 = vdwg.mxu0
        %v1180 = vld [vmem:[#allocation7 + $0x40] sm:$0xff]
        %v1181 = vld [vmem:[#allocation7 + $0x48] sm:$0xff]
        %v1182 = vld [vmem:[#allocation7 + $0x50] sm:$0xff]
        %v1183 = vld [vmem:[#allocation7 + $0x58] sm:$0xff]
        %v1185 = vsel %vm527, %v1177, 0
        %1187 = vmatprep.subr.mxu0 0.0
        %1188 = vmatpush1.msra.mxu0 0.0
        %1189 = vmatprep.subr.mxu0 0.0
        %1190 = vmatpush1.msra.mxu0 0.0
        %1191 = vmatprep.subr.mxu0 0.0
        %1192 = vmatpush1.msra.mxu0 0.0
        %1193 = vmatprep.subr.mxu0 0.0
        %1194 = vmatpush1.msra.mxu0 0.0
        %1195 = vmatprep.subr.mxu0 0.0
        %1196 = vmatpush1.msra.mxu0 0.0
        %1197 = vmatprep.subr.mxu0 0.0
        %1198 = vmatpush1.msra.mxu0 0.0
        %1199 = vmatprep.subr.mxu0 0.0
        %1200 = vmatpush1.msra.mxu0 0.0
        %1201 = vmatprep.subr.mxu0 0.0
        %1202 = vmatpush1.msra.mxu0 0.0
        %1203 = vmatprep.subr.mxu0 0.0
        %1204 = vmatpush1.msra.mxu0 0.0
        %1205 = vmatprep.subr.mxu0 0.0
        %1206 = vmatpush1.msra.mxu0 0.0
        %1207 = vmatprep.subr.mxu0 0.0
        %1208 = vmatpush1.msra.mxu0 0.0
        %1209 = vmatprep.subr.mxu0 0.0
        %1210 = vmatpush1.msra.mxu0 0.0
        %1211 = vmatprep.subr.mxu0 0.0
        %1212 = vmatpush1.msra.mxu0 %v1183
        %1213 = vmatprep.subr.mxu0 0.0
        %1214 = vmatpush1.msra.mxu0 %v1182
        %1215 = vmatprep.subr.mxu0 0.0
        %1216 = vmatpush1.msra.mxu0 %v1181
        %1217 = vmatprep.subr.mxu0 0.0
        %1218 = vmatpush1.msra.mxu0 %v1180
        %1219 = vmatprep.subr.mxu0 0.0
        %1220 = vmatpush2.msra.mxu0 0.0
        %1221 = vmatprep.subr.mxu0 0.0
        %1222 = vmatpush2.msra.mxu0 0.0
        %1223 = vmatprep.subr.mxu0 0.0
        %1224 = vmatpush2.msra.mxu0 0.0
        %1225 = vmatprep.subr.mxu0 0.0
        %1226 = vmatpush2.msra.mxu0 0.0
        %1227 = vmatprep.subr.mxu0 0.0
        %1228 = vmatpush2.msra.mxu0 0.0
        %1229 = vmatprep.subr.mxu0 0.0
        %1230 = vmatpush2.msra.mxu0 0.0
        %1231 = vmatprep.subr.mxu0 0.0
        %1232 = vmatpush2.msra.mxu0 0.0
        %1233 = vmatprep.subr.mxu0 0.0
        %1234 = vmatpush2.msra.mxu0 0.0
        %1235 = vmatprep.subr.mxu0 0.0
        %1236 = vmatpush2.msra.mxu0 0.0
        %1237 = vmatprep.subr.mxu0 0.0
        %1238 = vmatpush2.msra.mxu0 0.0
        %1239 = vmatprep.subr.mxu0 0.0
        %1240 = vmatpush2.msra.mxu0 0.0
        %1241 = vmatprep.subr.mxu0 0.0
        %1242 = vmatpush2.msra.mxu0 0.0
        %1243 = vmatprep.subr.mxu0 0.0
        %1244 = vmatpush2.msra.mxu0 0.0
        %1245 = vmatprep.subr.mxu0 0.0
        %1246 = vmatpush2.msra.mxu0 0.0
        %1247 = vmatprep.subr.mxu0 0.0
        %1248 = vmatpush2.msra.mxu0 0.0
        %1249 = vmatprep.subr.mxu0 0.0
        %1250 = vmatpush2.msra.mxu0 0.0
        %1251 = vmatprep.mubr.f32.mxu0 0.0
        %1252 = vmatmul.mubr.f32.gmra.mxu0 %v1185
        %v1253 = vpop.f32.mrf.mxu0
        %v1254 = vadd.f32 0.0, %v1253
        %v1255 = vpop.f32.mrf.mxu0
        %1256 = vdwg.mxu0
        %v1257 = vadd.f32 %v1010, %v1254
        %1258 = vrot.lane.b32.xlu0 %v453, 32
        %v1259 = vpop.permute.xlu0 %1258
        %1260 = vrot.lane.b32.xlu0 %v455, 32
        %v1261 = vpop.permute.xlu0 %1260
        %v1262 = vsel %vm527, %v1259, 0
        %v1264 = vsel %vm527, %v1261, 0
        %1266 = vmatprep.subr.mxu0 0.0
        %1267 = vmatpush1.xpose.msra.mxu0 0.0
        %1268 = vmatprep.subr.mxu0 0.0
        %1269 = vmatpush1.xpose.msra.mxu0 0.0
        %1270 = vmatprep.subr.mxu0 0.0
        %1271 = vmatpush1.xpose.msra.mxu0 0.0
        %1272 = vmatprep.subr.mxu0 0.0
        %1273 = vmatpush1.xpose.msra.mxu0 0.0
        %1274 = vmatprep.subr.mxu0 0.0
        %1275 = vmatpush1.xpose.msra.mxu0 0.0
        %1276 = vmatprep.subr.mxu0 0.0
        %1277 = vmatpush1.xpose.msra.mxu0 0.0
        %1278 = vmatprep.subr.mxu0 0.0
        %1279 = vmatpush1.xpose.msra.mxu0 0.0
        %1280 = vmatprep.subr.mxu0 0.0
        %1281 = vmatpush1.xpose.msra.mxu0 0.0
        %1282 = vmatprep.subr.mxu0 0.0
        %1283 = vmatpush1.xpose.msra.mxu0 0.0
        %1284 = vmatprep.subr.mxu0 0.0
        %1285 = vmatpush1.xpose.msra.mxu0 0.0
        %1286 = vmatprep.subr.mxu0 0.0
        %1287 = vmatpush1.xpose.msra.mxu0 0.0
        %1288 = vmatprep.subr.mxu0 0.0
        %1289 = vmatpush1.xpose.msra.mxu0 0.0
        %1290 = vmatprep.subr.mxu0 0.0
        %1291 = vmatpush1.xpose.msra.mxu0 0.0
        %1292 = vmatprep.subr.mxu0 0.0
        %1293 = vmatpush1.xpose.msra.mxu0 0.0
        %1294 = vmatprep.subr.mxu0 0.0
        %1295 = vmatpush1.xpose.msra.mxu0 0.0
        %1296 = vmatprep.subr.mxu0 0.0
        %1297 = vmatpush1.xpose.msra.mxu0 %v1264
        %1298 = vmatprep.subr.mxu0 0.0
        %1299 = vmatpush2.xpose.msra.mxu0 0.0
        %1300 = vmatprep.subr.mxu0 0.0
        %1301 = vmatpush2.xpose.msra.mxu0 0.0
        %1302 = vmatprep.subr.mxu0 0.0
        %1303 = vmatpush2.xpose.msra.mxu0 0.0
        %1304 = vmatprep.subr.mxu0 0.0
        %1305 = vmatpush2.xpose.msra.mxu0 0.0
        %1306 = vmatprep.subr.mxu0 0.0
        %1307 = vmatpush2.xpose.msra.mxu0 0.0
        %1308 = vmatprep.subr.mxu0 0.0
        %1309 = vmatpush2.xpose.msra.mxu0 0.0
        %1310 = vmatprep.subr.mxu0 0.0
        %1311 = vmatpush2.xpose.msra.mxu0 0.0
        %1312 = vmatprep.subr.mxu0 0.0
        %1313 = vmatpush2.xpose.msra.mxu0 0.0
        %1314 = vmatprep.subr.mxu0 0.0
        %1315 = vmatpush2.xpose.msra.mxu0 0.0
        %1316 = vmatprep.subr.mxu0 0.0
        %1317 = vmatpush2.xpose.msra.mxu0 0.0
        %1318 = vmatprep.subr.mxu0 0.0
        %1319 = vmatpush2.xpose.msra.mxu0 0.0
        %1320 = vmatprep.subr.mxu0 0.0
        %1321 = vmatpush2.xpose.msra.mxu0 0.0
        %1322 = vmatprep.subr.mxu0 0.0
        %1323 = vmatpush2.xpose.msra.mxu0 0.0
        %1324 = vmatprep.subr.mxu0 0.0
        %1325 = vmatpush2.xpose.msra.mxu0 0.0
        %1326 = vmatprep.subr.mxu0 0.0
        %1327 = vmatpush2.xpose.msra.mxu0 0.0
        %1328 = vmatprep.subr.mxu0 0.0
        %1329 = vmatpush2.xpose.msra.mxu0 0.0
        %1330 = vmatprep.mubr.f32.mxu0 0.0
        %1331 = vmatmul.mubr.f32.gmra.mxu0 %v1262
        %v1332 = vpop.f32.mrf.mxu0
        %v1333 = vadd.f32 0.0, %v1332
        %v1334 = vpop.f32.mrf.mxu0
        %1335 = vdwg.mxu0
        %v1336 = vmul.f32 %v1333, 0.17677669
        %v1337 = vsel %vm605, %v1336, -inf
        %1338 = vmax.xlane.f32.xlu0 %v1337
        %v1339 = vpop.xlane.xlu0 %1338
        %v1340 = vsub.f32 %v1336, %v1339
        %v1341 = vmul.f32 %v1340, 1.442695
        %v1342 = vpow.pop %v1341
        %v1343 = vsel %vm605, %v1342, 0.0
        %1344 = vadd.xlane.f32.xlu0 %v1343
        %v1345 = vpop.xlane.xlu0 %1344
        %v1346 = vrcp.pop %v1345
        %v1347 = vmul.f32 %v1342, %v1346
        %v1348 = vadd.f32 %v1103, %v1347
        %1349 = vrot.lane.b32.xlu0 %v524, 32
        %v1350 = vpop.permute.xlu0 %1349
        %v1353 = vsel %vm605, %v1347, 0
        %1355 = vmatprep.subr.mxu0 0.0
        %1356 = vmatpush1.msra.mxu0 0.0
        %1357 = vmatprep.subr.mxu0 0.0
        %1358 = vmatpush1.msra.mxu0 0.0
        %1359 = vmatprep.subr.mxu0 0.0
        %1360 = vmatpush1.msra.mxu0 0.0
        %1361 = vmatprep.subr.mxu0 0.0
        %1362 = vmatpush1.msra.mxu0 0.0
        %1363 = vmatprep.subr.mxu0 0.0
        %1364 = vmatpush1.msra.mxu0 0.0
        %1365 = vmatprep.subr.mxu0 0.0
        %1366 = vmatpush1.msra.mxu0 0.0
        %1367 = vmatprep.subr.mxu0 0.0
        %1368 = vmatpush1.msra.mxu0 0.0
        %1369 = vmatprep.subr.mxu0 0.0
        %1370 = vmatpush1.msra.mxu0 0.0
        %1371 = vmatprep.subr.mxu0 0.0
        %1372 = vmatpush1.msra.mxu0 0.0
        %1373 = vmatprep.subr.mxu0 0.0
        %1374 = vmatpush1.msra.mxu0 0.0
        %1375 = vmatprep.subr.mxu0 0.0
        %1376 = vmatpush1.msra.mxu0 0.0
        %1377 = vmatprep.subr.mxu0 0.0
        %1378 = vmatpush1.msra.mxu0 0.0
        %1379 = vmatprep.subr.mxu0 0.0
        %1380 = vmatpush1.msra.mxu0 0.0
        %1381 = vmatprep.subr.mxu0 0.0
        %1382 = vmatpush1.msra.mxu0 0.0
        %1383 = vmatprep.subr.mxu0 0.0
        %1384 = vmatpush1.msra.mxu0 0.0
        %1385 = vmatprep.subr.mxu0 0.0
        %1386 = vmatpush1.msra.mxu0 %v1350
        %1387 = vmatprep.subr.mxu0 0.0
        %1388 = vmatpush2.msra.mxu0 0.0
        %1389 = vmatprep.subr.mxu0 0.0
        %1390 = vmatpush2.msra.mxu0 0.0
        %1391 = vmatprep.subr.mxu0 0.0
        %1392 = vmatpush2.msra.mxu0 0.0
        %1393 = vmatprep.subr.mxu0 0.0
        %1394 = vmatpush2.msra.mxu0 0.0
        %1395 = vmatprep.subr.mxu0 0.0
        %1396 = vmatpush2.msra.mxu0 0.0
        %1397 = vmatprep.subr.mxu0 0.0
        %1398 = vmatpush2.msra.mxu0 0.0
        %1399 = vmatprep.subr.mxu0 0.0
        %1400 = vmatpush2.msra.mxu0 0.0
        %1401 = vmatprep.subr.mxu0 0.0
        %1402 = vmatpush2.msra.mxu0 0.0
        %1403 = vmatprep.subr.mxu0 0.0
        %1404 = vmatpush2.msra.mxu0 0.0
        %1405 = vmatprep.subr.mxu0 0.0
        %1406 = vmatpush2.msra.mxu0 0.0
        %1407 = vmatprep.subr.mxu0 0.0
        %1408 = vmatpush2.msra.mxu0 0.0
        %1409 = vmatprep.subr.mxu0 0.0
        %1410 = vmatpush2.msra.mxu0 0.0
        %1411 = vmatprep.subr.mxu0 0.0
        %1412 = vmatpush2.msra.mxu0 0.0
        %1413 = vmatprep.subr.mxu0 0.0
        %1414 = vmatpush2.msra.mxu0 0.0
        %1415 = vmatprep.subr.mxu0 0.0
        %1416 = vmatpush2.msra.mxu0 0.0
        %1417 = vmatprep.subr.mxu0 0.0
        %1418 = vmatpush2.msra.mxu0 0.0
        %1419 = vmatprep.mubr.f32.mxu0 0.0
        %1420 = vmatmul.mubr.f32.gmra.mxu0 %v1353
        %v1421 = vpop.f32.mrf.mxu0
        %v1422 = vadd.f32 0.0, %v1421
        %v1423 = vpop.f32.mrf.mxu0
        %1424 = vdwg.mxu0
        %v1425 = vld [vmem:[#allocation7 + $0x60] sm:$0xff]
        %v1426 = vld [vmem:[#allocation7 + $0x68] sm:$0xff]
        %v1427 = vld [vmem:[#allocation7 + $0x70] sm:$0xff]
        %v1428 = vld [vmem:[#allocation7 + $0x78] sm:$0xff]
        %v1430 = vsel %vm527, %v1422, 0
        %1432 = vmatprep.subr.mxu0 0.0
        %1433 = vmatpush1.msra.mxu0 0.0
        %1434 = vmatprep.subr.mxu0 0.0
        %1435 = vmatpush1.msra.mxu0 0.0
        %1436 = vmatprep.subr.mxu0 0.0
        %1437 = vmatpush1.msra.mxu0 0.0
        %1438 = vmatprep.subr.mxu0 0.0
        %1439 = vmatpush1.msra.mxu0 0.0
        %1440 = vmatprep.subr.mxu0 0.0
        %1441 = vmatpush1.msra.mxu0 0.0
        %1442 = vmatprep.subr.mxu0 0.0
        %1443 = vmatpush1.msra.mxu0 0.0
        %1444 = vmatprep.subr.mxu0 0.0
        %1445 = vmatpush1.msra.mxu0 0.0
        %1446 = vmatprep.subr.mxu0 0.0
        %1447 = vmatpush1.msra.mxu0 0.0
        %1448 = vmatprep.subr.mxu0 0.0
        %1449 = vmatpush1.msra.mxu0 0.0
        %1450 = vmatprep.subr.mxu0 0.0
        %1451 = vmatpush1.msra.mxu0 0.0
        %1452 = vmatprep.subr.mxu0 0.0
        %1453 = vmatpush1.msra.mxu0 0.0
        %1454 = vmatprep.subr.mxu0 0.0
        %1455 = vmatpush1.msra.mxu0 0.0
        %1456 = vmatprep.subr.mxu0 0.0
        %1457 = vmatpush1.msra.mxu0 %v1428
        %1458 = vmatprep.subr.mxu0 0.0
        %1459 = vmatpush1.msra.mxu0 %v1427
        %1460 = vmatprep.subr.mxu0 0.0
        %1461 = vmatpush1.msra.mxu0 %v1426
        %1462 = vmatprep.subr.mxu0 0.0
        %1463 = vmatpush1.msra.mxu0 %v1425
        %1464 = vmatprep.subr.mxu0 0.0
        %1465 = vmatpush2.msra.mxu0 0.0
        %1466 = vmatprep.subr.mxu0 0.0
        %1467 = vmatpush2.msra.mxu0 0.0
        %1468 = vmatprep.subr.mxu0 0.0
        %1469 = vmatpush2.msra.mxu0 0.0
        %1470 = vmatprep.subr.mxu0 0.0
        %1471 = vmatpush2.msra.mxu0 0.0
        %1472 = vmatprep.subr.mxu0 0.0
        %1473 = vmatpush2.msra.mxu0 0.0
        %1474 = vmatprep.subr.mxu0 0.0
        %1475 = vmatpush2.msra.mxu0 0.0
        %1476 = vmatprep.subr.mxu0 0.0
        %1477 = vmatpush2.msra.mxu0 0.0
        %1478 = vmatprep.subr.mxu0 0.0
        %1479 = vmatpush2.msra.mxu0 0.0
        %1480 = vmatprep.subr.mxu0 0.0
        %1481 = vmatpush2.msra.mxu0 0.0
        %1482 = vmatprep.subr.mxu0 0.0
        %1483 = vmatpush2.msra.mxu0 0.0
        %1484 = vmatprep.subr.mxu0 0.0
        %1485 = vmatpush2.msra.mxu0 0.0
        %1486 = vmatprep.subr.mxu0 0.0
        %1487 = vmatpush2.msra.mxu0 0.0
        %1488 = vmatprep.subr.mxu0 0.0
        %1489 = vmatpush2.msra.mxu0 0.0
        %1490 = vmatprep.subr.mxu0 0.0
        %1491 = vmatpush2.msra.mxu0 0.0
        %1492 = vmatprep.subr.mxu0 0.0
        %1493 = vmatpush2.msra.mxu0 0.0
        %1494 = vmatprep.subr.mxu0 0.0
        %1495 = vmatpush2.msra.mxu0 0.0
        %1496 = vmatprep.mubr.f32.mxu0 0.0
        %1497 = vmatmul.mubr.f32.gmra.mxu0 %v1430
        %v1498 = vpop.f32.mrf.mxu0
        %v1499 = vadd.f32 0.0, %v1498
        %v1500 = vpop.f32.mrf.mxu0
        %1501 = vdwg.mxu0
        %v1502 = vadd.f32 %v1257, %v1499
        %v1503 = vld [vmem:[#allocation8] sm:$0x1]
        %v1505 = vlaneseq
        %v1506 = vshrl.u32 %v1505, 7
        %v1507 = vsub.s32 0, %v1506
        %v1508 = vrot.slane %v1503, %v1507
        %v1510 = vadd.f32 %v1502, %v1508
        %1511 = vst [vmem:[%s312] sm:$0xff] %v1510
        %v1512 = vmul.f32 %v1348, 0.25
        %1513 = vst.msk [vmem:[%s319] sm:$0xff] %vm605, %v1512
        %s1514 = sand.u32 %s147, 1
        %s1515 = scalar_lea.sflag [#allocation4], %s1514
        %s1516 = sand.u32 %s147, 1
        %s1517 = smul.addr %s1516, 8
        %s1518 = scalar_lea.vmem [#allocation10], %s1517
        %s1519 = sand.u32 %s173, 1
        %s1520 = scalar_lea.sflag [#allocation12], %s1519
        %s1521 = sand.u32 %s173, 1
        %s1522 = smul.addr %s1521, 8
        %s1523 = scalar_lea.vmem [#allocation11], %s1522
        // Predicated region
        $region57: #{self_attention.1} parent=39 // pred_check
          %p1524 = pneg %p157
        $region58: #{self_attention.1} parent=39 // pred_check_branch
          %1526 = sbr.rel (%p1524) target = $region60
        $region59: #{self_attention.1} parent=39 // pred_region
          %s1528 = ssub.s32 128, 128
          %1529 = vsyncadd %s1515, %s1528
          %s1530 = smul.addr %s29, 128
          %s1531 = scalar_lea.hbm %s5, %s1530
          %s1533 = sshll.u32 %s1518, 4
          %s1534 = int_to_ptr.vmem [resolvable:$true] %s1533
          %1536 = dma.vmem_to_hbm [thread:$0]  %s1534, 128, %s1531, %s1515
        $region60: #{self_attention.1} parent=39 // pred_fallthru
          _
        // Predicated region
        $region61: #{self_attention.1} parent=39 // pred_check
          %p1537 = pneg %p183
        $region62: #{self_attention.1} parent=39 // pred_check_branch
          %1539 = sbr.rel (%p1537) target = $region64
        $region63: #{self_attention.1} parent=39 // pred_region
          %s1541 = ssub.s32 128, 128
          %1542 = vsyncadd %s1520, %s1541
          %s1543 = smul.addr %s29, 128
          %s1544 = scalar_lea.hbm %s6, %s1543
          %s1546 = sshll.u32 %s1523, 4
          %s1547 = int_to_ptr.vmem [resolvable:$true] %s1546
          %1549 = dma.vmem_to_hbm [thread:$0]  %s1547, 128, %s1544, %s1520
        $region64: #{self_attention.1} parent=39 // pred_fallthru
          _
      $region40: #{self_attention.1} parent=5 // pred_fallthru
        _
      %p1550 = scmp.le.s32.totalorder 2, %s24
      // Predicated region
      $region65: #{self_attention.1} parent=5 // pred_check
        %p1551 = pneg %p1550
      $region66: #{self_attention.1} parent=5 // pred_check_branch
        %1553 = sbr.rel (%p1551) target = $region68
      $region67: #{self_attention.1} parent=5 // pred_region
        %s1554 = ssub.s32 %s24, 2
        // Predicated region
        $region69: #{self_attention.1} parent=67 // pred_check
          %p1555 = pneg %p163
        $region70: #{self_attention.1} parent=67 // pred_check_branch
          %1557 = sbr.rel (%p1555) target = $region72
        $region71: #{self_attention.1} parent=67 // pred_region
          %s1558 = sand.u32 %s148, 1
          %s1559 = scalar_lea.sflag [#allocation4], %s1558
          %s1560 = sand.u32 %s148, 1
          %s1561 = smul.addr %s1560, 8
          %s1562 = scalar_lea.vmem [#allocation10], %s1561
          %1563 = dma.done %s1559, 128
        $region72: #{self_attention.1} parent=67 // pred_fallthru
          _
        // Predicated region
        $region73: #{self_attention.1} parent=67 // pred_check
          %p1564 = pneg %p189
        $region74: #{self_attention.1} parent=67 // pred_check_branch
          %1566 = sbr.rel (%p1564) target = $region76
        $region75: #{self_attention.1} parent=67 // pred_region
          %s1567 = sand.u32 %s174, 1
          %s1568 = scalar_lea.sflag [#allocation12], %s1567
          %s1569 = sand.u32 %s174, 1
          %s1570 = smul.addr %s1569, 8
          %s1571 = scalar_lea.vmem [#allocation11], %s1570
          %1572 = dma.done %s1568, 128
        $region76: #{self_attention.1} parent=67 // pred_fallthru
          _
      $region68: #{self_attention.1} parent=5 // pred_fallthru
        _
    $region6: #{self_attention.1} parent=1 // loop_footer
      %s28 = sadd.s32 1, %s24
    $region7: #{self_attention.1} parent=1 // loop_footer_branch
      %23 = sbr.rel target = $region3
    $region8: #{self_attention.1} parent=1 // loop_exit
      _
    %1573 = vsyncpa [#allocation3], 1
    %s1574 = scalar_lea.sflag [#allocation3], 1
    %1575 = vsyncpa %s1574, 1
    %1576 = vsyncpa [#allocation6], 1
    %1577 = vsyncpa [#allocation9], 1
    %1578 = vsyncpa [#allocation4], 1
    %s1579 = scalar_lea.sflag [#allocation4], 1
    %1580 = vsyncpa %s1579, 1
    %1581 = vsyncpa [#allocation12], 1
    %s1582 = scalar_lea.sflag [#allocation12], 1
    %1583 = vsyncpa %s1582, 1

</llo_original>
